<compile_context>
chip_gen: v7x
topology: tpu7x:2x2x1
jax: 0.10.0
libtpu: 0.0.40
codegen_flags: <defaults>
</compile_context>

<pallas_src>
import functools

import jax
import jax.numpy as jnp
from jax.experimental import pallas as pl
from jax.experimental.pallas import tpu as pltpu


# ----------------------------------------------------------------------------
# In-kernel helpers (fp32 math)
# ----------------------------------------------------------------------------
def _ln_f32(x, g, b, eps):
    mean = jnp.mean(x, axis=-1, keepdims=True)
    var = jnp.mean(jnp.square(x - mean), axis=-1, keepdims=True)
    return (x - mean) * jax.lax.rsqrt(var + eps) * g + b


def _gelu_f32(x):
    # tanh-approximate GELU (EUP-friendly).
    # TODO(synk): HuggingFace BERT uses exact erf-GELU; tanh approx differs ~1e-3.
    c = 0.7978845608028654  # sqrt(2/pi)
    return 0.5 * x * (1.0 + jnp.tanh(c * (x + 0.044715 * x * x * x)))


# ----------------------------------------------------------------------------
# Pallas kernels
# ----------------------------------------------------------------------------
def _layer_norm_kernel(x_ref, g_ref, b_ref, o_ref, *, eps):
    x = x_ref[...].astype(jnp.float32)
    o_ref[...] = _ln_f32(x, g_ref[...], b_ref[...], eps).astype(o_ref.dtype)


def _encoder_stack_kernel(h_ref, m_ref, wqkv_ref, bqkv_ref, wo_ref, bo_ref,
                          g1_ref, b1_ref, wi_ref, bi_ref, wo2_ref, bo2_ref,
                          g2_ref, b2_ref, o_ref, hcar_ref, *, nh, dh, eps):
    """One BERT encoder layer; grid = (batch, layer), hidden carried in VMEM."""
    l = pl.program_id(1)
    n_layers = pl.num_programs(1)
    S = h_ref.shape[1]
    H = nh * dh

    # ---- initialize the fp32 hidden-state carry from the embeddings (l==0) ----
    @pl.when(l == 0)
    def _():
        hcar_ref[...] = h_ref[0].astype(jnp.float32)

    h32 = hcar_ref[...]                               # [S, H] fp32
    h_bf = h32.astype(jnp.bfloat16)

    # ---- fused QKV projection: one lane-dense [S, 3H] MXU pass ----
    qkv = jnp.dot(h_bf, wqkv_ref[0], preferred_element_type=jnp.float32)
    qkv = qkv + bqkv_ref[0]                           # [S, 3H] fp32

    # ---- additive attention-mask bias from the [1, S] mask (fp32 softmax) ----
    neg = (1.0 - m_ref[0]) * (-1e9)                   # [1, S]

    # 1/sqrt(dh) folded into the whole Q slab once (not per head / per score).
    q_all = qkv[:, :H] * (1.0 / (dh ** 0.5))          # [S, H] fp32
    wo = wo_ref[0]                                    # [H, H] bf16

    # ---- per-head attention; output projection accumulated per head ----
    attn = jnp.zeros((S, H), jnp.float32)
    for hh in range(nh):
        q_h = q_all[:, hh * dh:(hh + 1) * dh].astype(jnp.bfloat16)
        k_h = qkv[:, H + hh * dh:H + (hh + 1) * dh].astype(jnp.bfloat16)
        v_h = qkv[:, 2 * H + hh * dh:2 * H + (hh + 1) * dh].astype(jnp.bfloat16)

        s = jax.lax.dot_general(                       # q @ k^T -> [S, S] fp32
            q_h, k_h, (((1,), (1,)), ((), ())),
            preferred_element_type=jnp.float32)
        s = s + neg                                    # broadcast over q rows

        m = jnp.max(s, axis=-1, keepdims=True)
        p = jnp.exp(s - m)
        p = p * pl.reciprocal(jnp.sum(p, axis=-1, keepdims=True), approx=True)

        ctx = jnp.dot(p.astype(jnp.bfloat16), v_h,
                      preferred_element_type=jnp.float32)          # [S, dh]
        # accumulate ctx_h @ Wo[h*dh:(h+1)*dh, :]  == concat(ctx) @ Wo
        attn = attn + jnp.dot(ctx.astype(jnp.bfloat16),
                              wo[hh * dh:(hh + 1) * dh, :],
                              preferred_element_type=jnp.float32)
    attn = attn + bo_ref[0]

    # ---- residual + LayerNorm 1 (fp32) ----
    h1 = _ln_f32(attn + h32, g1_ref[0], b1_ref[0], eps)             # [S, H]

    # ---- FFN: up-proj + GELU + down-proj ----
    inter = jnp.dot(h1.astype(jnp.bfloat16), wi_ref[0],
                    preferred_element_type=jnp.float32) + bi_ref[0]
    inter = _gelu_f32(inter)
    ffn = jnp.dot(inter.astype(jnp.bfloat16), wo2_ref[0],
                  preferred_element_type=jnp.float32) + bo2_ref[0]

    # ---- residual + LayerNorm 2 (fp32); update the carry ----
    h2 = _ln_f32(ffn + h1, g2_ref[0], b2_ref[0], eps)
    hcar_ref[...] = h2

    # ---- write the final hidden state to HBM only once per batch row ----
    @pl.when(l == n_layers - 1)
    def _():
        o_ref[0] = h2.astype(o_ref.dtype)


def _head_kernel(x_ref, w_ref, b_ref, o_ref):
    """logits = x @ w_pad + b_pad with the class dim padded to 128 lanes."""
    y = jnp.dot(x_ref[...], w_ref[...], preferred_element_type=jnp.float32)
    o_ref[...] = (y + b_ref[...]).astype(o_ref.dtype)


# ----------------------------------------------------------------------------
# pallas_call wrappers
# ----------------------------------------------------------------------------
def _pick_tm(M):
    for tm in (256, 128, 64, 32, 16):
        if M % tm == 0:
            return tm
    return M


def layer_norm(x, gamma, beta, eps=1e-12, out_dtype=jnp.bfloat16):
    M, H = x.shape
    tm = _pick_tm(M)
    return pl.pallas_call(
        functools.partial(_layer_norm_kernel, eps=eps),
        out_shape=jax.ShapeDtypeStruct((M, H), out_dtype),
        grid=(M // tm,),
        in_specs=[
            pl.BlockSpec((tm, H), lambda i: (i, 0)),
            pl.BlockSpec((1, H), lambda i: (0, 0)),
            pl.BlockSpec((1, H), lambda i: (0, 0)),
        ],
        out_specs=pl.BlockSpec((tm, H), lambda i: (i, 0)),
        compiler_params=pltpu.CompilerParams(dimension_semantics=("parallel",)),
    )(x, gamma, beta)


def encoder_stack(h, mask3, params, *, nh, dh, eps=1e-12):
    """All encoder layers in a single pallas_call; grid = (batch, layer)."""
    B, S, H = h.shape
    L = params["wqkv"].shape[0]
    I = params["wi"].shape[2]
    row = lambda b, l: (b, 0, 0)          # per-batch-row blocks (fixed across l)
    per_layer = lambda b, l: (l, 0, 0)    # per-layer weight blocks
    return pl.pallas_call(
        functools.partial(_encoder_stack_kernel, nh=nh, dh=dh, eps=eps),
        out_shape=jax.ShapeDtypeStruct((B, S, H), jnp.bfloat16),
        grid=(B, L),
        in_specs=[
            pl.BlockSpec((1, S, H), row),           # hidden (this batch row)
            pl.BlockSpec((1, 1, S), row),           # attention mask (this row)
            pl.BlockSpec((1, H, 3 * H), per_layer),  # fused Wqkv
            pl.BlockSpec((1, 1, 3 * H), per_layer),
            pl.BlockSpec((1, H, H), per_layer),     # Wo
            pl.BlockSpec((1, 1, H), per_layer),
            pl.BlockSpec((1, 1, H), per_layer),     # ln1 gamma
            pl.BlockSpec((1, 1, H), per_layer),     # ln1 beta
            pl.BlockSpec((1, H, I), per_layer),     # Wi
            pl.BlockSpec((1, 1, I), per_layer),
            pl.BlockSpec((1, I, H), per_layer),     # Wo2
            pl.BlockSpec((1, 1, H), per_layer),
            pl.BlockSpec((1, 1, H), per_layer),     # ln2 gamma
            pl.BlockSpec((1, 1, H), per_layer),     # ln2 beta
        ],
        out_specs=pl.BlockSpec((1, S, H), row),
        scratch_shapes=[pltpu.VMEM((S, H), jnp.float32)],   # hidden-state carry
        compiler_params=pltpu.CompilerParams(
            dimension_semantics=("parallel", "arbitrary")),
    )(h, mask3, params["wqkv"], params["bqkv"], params["wo"], params["bo"],
      params["ln1_g"], params["ln1_b"], params["wi"], params["bi"],
      params["wo2"], params["bo2"], params["ln2_g"], params["ln2_b"])


def classifier_head(x, w_pad, b_pad):
    M, H = x.shape
    NP = w_pad.shape[1]
    tm = _pick_tm(M)
    return pl.pallas_call(
        _head_kernel,
        out_shape=jax.ShapeDtypeStruct((M, NP), jnp.float32),
        grid=(M // tm,),
        in_specs=[
            pl.BlockSpec((tm, H), lambda i: (i, 0)),
            pl.BlockSpec((H, NP), lambda i: (0, 0)),
            pl.BlockSpec((1, NP), lambda i: (0, 0)),
        ],
        out_specs=pl.BlockSpec((tm, NP), lambda i: (i, 0)),
        compiler_params=pltpu.CompilerParams(dimension_semantics=("parallel",)),
    )(x, w_pad, b_pad)


# ----------------------------------------------------------------------------
# Model (scaled-down BERT) parameters & forward
# ----------------------------------------------------------------------------
CFG = dict(
    vocab=128, hidden=64, heads=4, layers=2, inter=128,
    max_pos=32, type_vocab=2, num_classes=2,
)
_HEAD_PAD = 128  # pad the 2-class head to a full lane width


def init_params(key, cfg):
    H, I, NC, L = cfg["hidden"], cfg["inter"], cfg["num_classes"], cfg["layers"]

    def nrm(k, shape, dtype=jnp.bfloat16):
        return (0.02 * jax.random.normal(k, shape, jnp.float32)).astype(dtype)

    keys = iter(jax.random.split(key, 8))
    p = {
        "word_emb": nrm(next(keys), (cfg["vocab"], H), jnp.float32),
        "pos_emb": nrm(next(keys), (cfg["max_pos"], H), jnp.float32),
        "type_emb": nrm(next(keys), (cfg["type_vocab"], H), jnp.float32),
        "emb_ln_g": jnp.ones((1, H), jnp.float32),
        "emb_ln_b": jnp.zeros((1, H), jnp.float32),
        # per-layer weights stacked along a leading layer axis (streamed by
        # the encoder-stack kernel's BlockSpec index_map).
        "wqkv": nrm(next(keys), (L, H, 3 * H)),
        "bqkv": jnp.zeros((L, 1, 3 * H), jnp.float32),
        "wo": nrm(next(keys), (L, H, H)),
        "bo": jnp.zeros((L, 1, H), jnp.float32),
        "ln1_g": jnp.ones((L, 1, H), jnp.float32),
        "ln1_b": jnp.zeros((L, 1, H), jnp.float32),
        "wi": nrm(next(keys), (L, H, I)),
        "bi": jnp.zeros((L, 1, I), jnp.float32),
        "wo2": nrm(next(keys), (L, I, H)),
        "bo2": jnp.zeros((L, 1, H), jnp.float32),
        "ln2_g": jnp.ones((L, 1, H), jnp.float32),
        "ln2_b": jnp.zeros((L, 1, H), jnp.float32),
    }
    lo_w = 0.02 * jax.random.normal(next(keys), (H, NC), jnp.float32)
    p["lo_w_pad"] = (jnp.zeros((H, _HEAD_PAD), jnp.float32)
                     .at[:, :NC].set(lo_w)).astype(jnp.bfloat16)
    p["lo_b_pad"] = jnp.zeros((1, _HEAD_PAD), jnp.float32)
    return p


def bert_base_uncased_tweet_forward(params, ids, mask, token_type_ids, cfg=CFG):
    """Returns (start_logits, end_logits), each [B, S] — matches the PyTorch module."""
    B, S = ids.shape
    H = cfg["hidden"]
    nh = cfg["heads"]
    dh = H // nh
    M = B * S

    # --- embeddings (gathers stay in XLA glue; LayerNorm is a Pallas kernel) ---
    pos = jnp.arange(S, dtype=jnp.int32)
    emb = (jnp.take(params["word_emb"], ids, axis=0)
           + jnp.take(params["pos_emb"], pos, axis=0)[None, :, :]
           + jnp.take(params["type_emb"], token_type_ids, axis=0))  # [B,S,H] f32
    h = layer_norm(emb.reshape(M, H), params["emb_ln_g"],
                   params["emb_ln_b"]).reshape(B, S, H)             # bf16

    # mask passed as [B, 1, S]; additive bias is built inside the kernel.
    mask3 = mask.astype(jnp.float32).reshape(B, 1, S)

    # --- encoder: one fused pallas_call for the whole stack ---
    h = encoder_stack(h, mask3, params, nh=nh, dh=dh)

    # pooled_output (tanh(W·CLS+b)) is returned by BertModel but unused by this
    # head, so it is intentionally not computed.

    # --- classification head: Linear(H, 2) padded to 128 lanes, split in glue ---
    logits_pad = classifier_head(h.reshape(M, H),
                                 params["lo_w_pad"], params["lo_b_pad"])
    start_logits = logits_pad[:, 0].reshape(B, S)
    end_logits = logits_pad[:, 1].reshape(B, S)
    return start_logits, end_logits


# ----------------------------------------------------------------------------
# Pure-JAX reference (fp32) for a tolerance check
# ----------------------------------------------------------------------------
def reference_forward(params, ids, mask, token_type_ids, cfg=CFG):
    B, S = ids.shape
    H, nh, L = cfg["hidden"], cfg["heads"], cfg["layers"]
    dh = H // nh

    def ln(x, g, b, eps=1e-12):
        mu = x.mean(-1, keepdims=True)
        var = ((x - mu) ** 2).mean(-1, keepdims=True)
        return (x - mu) * jax.lax.rsqrt(var + eps) * g + b

    pos = jnp.arange(S, dtype=jnp.int32)
    x = (jnp.take(params["word_emb"], ids, axis=0)
         + jnp.take(params["pos_emb"], pos, axis=0)[None]
         + jnp.take(params["type_emb"], token_type_ids, axis=0))
    x = ln(x, params["emb_ln_g"][0], params["emb_ln_b"][0])
    bias = (1.0 - mask.astype(jnp.float32))[:, None, None, :] * (-1e9)
    for l in range(L):
        qkv = x @ params["wqkv"][l].astype(jnp.float32) + params["bqkv"][l, 0]
        q, k, v = qkv[..., :H], qkv[..., H:2 * H], qkv[..., 2 * H:]
        q = q.reshape(B, S, nh, dh).transpose(0, 2, 1, 3) / (dh ** 0.5)
        k = k.reshape(B, S, nh, dh).transpose(0, 2, 1, 3)
        v = v.reshape(B, S, nh, dh).transpose(0, 2, 1, 3)
        s = jnp.einsum("bhqd,bhkd->bhqk", q, k) + bias
        p = jax.nn.softmax(s, axis=-1)
        ctx = jnp.einsum("bhqk,bhkd->bhqd", p, v).transpose(0, 2, 1, 3).reshape(B, S, H)
        attn = ctx @ params["wo"][l].astype(jnp.float32) + params["bo"][l, 0]
        x = ln(attn + x, params["ln1_g"][l, 0], params["ln1_b"][l, 0])
        inter = x @ params["wi"][l].astype(jnp.float32) + params["bi"][l, 0]
        inter = _gelu_f32(inter)
        ffn = inter @ params["wo2"][l].astype(jnp.float32) + params["bo2"][l, 0]
        x = ln(ffn + x, params["ln2_g"][l, 0], params["ln2_b"][l, 0])
    logits = (x.reshape(B * S, H) @ params["lo_w_pad"].astype(jnp.float32)
              + params["lo_b_pad"][0])
    return logits[:, 0].reshape(B, S), logits[:, 1].reshape(B, S)


# ----------------------------------------------------------------------------
if __name__ == "__main__":
    B, S = 2, 8
    key = jax.random.PRNGKey(0)
    k_params, k_ids = jax.random.split(key)

    params = init_params(k_params, CFG)
    ids = jax.random.randint(k_ids, (B, S), 0, CFG["vocab"], dtype=jnp.int32)
    lengths = jnp.array([8, 6], dtype=jnp.int32)
    mask = (jnp.arange(S)[None, :] < lengths[:, None]).astype(jnp.int32)
    token_type_ids = jnp.zeros((B, S), dtype=jnp.int32)

    fwd = jax.jit(bert_base_uncased_tweet_forward)
    start_logits, end_logits = fwd(params, ids, mask, token_type_ids)
    jax.block_until_ready((start_logits, end_logits))

    assert start_logits.shape == (B, S) and end_logits.shape == (B, S)
    assert bool(jnp.all(jnp.isfinite(start_logits)))
    assert bool(jnp.all(jnp.isfinite(end_logits)))

    # tolerance check vs the pure-JAX fp32 reference (bf16 MXU paths in kernel).
    ref_start, ref_end = reference_forward(params, ids, mask, token_type_ids)
    err = max(float(jnp.max(jnp.abs(start_logits - ref_start))),
              float(jnp.max(jnp.abs(end_logits - ref_end))))
    assert err < 5e-2, f"mismatch vs pure-JAX reference: {err}"

    print("KERNEL_OK")
</pallas_src>

<mosaic_0001>
module attributes {stable_mosaic.version = 11 : i64} {
  func.func @_head_kernel(%arg0: i32, %arg1: memref<16x64xbf16, #tpu.memory_space<vmem>>, %arg2: memref<64x128xbf16, #tpu.memory_space<vmem>>, %arg3: memref<1x128xf32, #tpu.memory_space<vmem>>, %arg4: memref<16x128xf32, #tpu.memory_space<vmem>>) attributes {dimension_semantics = [#tpu.dimension_semantics<parallel>], iteration_bounds = array<i64: 1>, scalar_prefetch = 0 : i64, scratch_operands = 0 : i64, tpu.core_type = #tpu.core_type<tc>, window_params = [{transform_indices = @transform_0, window_bounds = array<i64: 16, 64>}, {pipeline_mode = #tpu.pipeline_mode<synchronous>, transform_indices = @transform_1, window_bounds = array<i64: 64, 128>}, {pipeline_mode = #tpu.pipeline_mode<synchronous>, transform_indices = @transform_2, window_bounds = array<i64: 1, 128>}, {transform_indices = @transform_3, window_bounds = array<i64: 16, 128>}]} {
    %c0 = arith.constant 0 : index
    %c0_0 = arith.constant 0 : index
    %0 = vector.load %arg1[%c0, %c0_0] : memref<16x64xbf16, #tpu.memory_space<vmem>>, vector<16x64xbf16>
    %c0_1 = arith.constant 0 : index
    %c0_2 = arith.constant 0 : index
    %1 = vector.load %arg2[%c0_1, %c0_2] : memref<64x128xbf16, #tpu.memory_space<vmem>>, vector<64x128xbf16>
    %cst = arith.constant dense<0.000000e+00> : vector<16x128xf32>
    %2 = tpu.matmul %0, %1, %cst {dimension_numbers = #tpu.dot_dimension_numbers<[1], [0], [0], [1], [0, 0, 1, 1], [], []>} : vector<16x64xbf16>, vector<64x128xbf16>, vector<16x128xf32> -> vector<16x128xf32>
    %c0_3 = arith.constant 0 : index
    %c0_4 = arith.constant 0 : index
    %3 = vector.load %arg3[%c0_3, %c0_4] : memref<1x128xf32, #tpu.memory_space<vmem>>, vector<1x128xf32>
    %4 = vector.broadcast %3 : vector<1x128xf32> to vector<16x128xf32>
    %5 = arith.addf %2, %4 : vector<16x128xf32>
    %c0_5 = arith.constant 0 : index
    %c0_6 = arith.constant 0 : index
    %6 = vector.load %arg4[%c0_5, %c0_6] : memref<16x128xf32, #tpu.memory_space<vmem>>, vector<16x128xf32>
    tpu.vector_store %arg4[%c0_5, %c0_6], %5 {strides = array<i32>} : memref<16x128xf32, #tpu.memory_space<vmem>>, vector<16x128xf32>,
    return
  }
  func.func @transform_0(%arg0: i32) -> (i32, i32) {
    %c0_i32 = arith.constant 0 : i32
    %c0_i32_0 = arith.constant 0 : i32
    return %arg0, %c0_i32 : i32, i32
  }
  func.func @transform_1(%arg0: i32) -> (i32, i32) {
    %c0_i32 = arith.constant 0 : i32
    %c0_i32_0 = arith.constant 0 : i32
    %c0_i32_1 = arith.constant 0 : i32
    return %c0_i32, %c0_i32_0 : i32, i32
  }
  func.func @transform_2(%arg0: i32) -> (i32, i32) {
    %c0_i32 = arith.constant 0 : i32
    %c0_i32_0 = arith.constant 0 : i32
    %c0_i32_1 = arith.constant 0 : i32
    return %c0_i32, %c0_i32_0 : i32, i32
  }
  func.func @transform_3(%arg0: i32) -> (i32, i32) {
    %c0_i32 = arith.constant 0 : i32
    %c0_i32_0 = arith.constant 0 : i32
    return %arg0, %c0_i32 : i32, i32
  }
}

module attributes {stable_mosaic.version = 11 : i64} {
  func.func @_encoder_stack_kernel(%arg0: i32, %arg1: i32, %arg2: memref<1x8x64xbf16, #tpu.memory_space<vmem>>, %arg3: memref<1x1x8xf32, #tpu.memory_space<vmem>>, %arg4: memref<1x64x192xbf16, #tpu.memory_space<vmem>>, %arg5: memref<1x1x192xf32, #tpu.memory_space<vmem>>, %arg6: memref<1x64x64xbf16, #tpu.memory_space<vmem>>, %arg7: memref<1x1x64xf32, #tpu.memory_space<vmem>>, %arg8: memref<1x1x64xf32, #tpu.memory_space<vmem>>, %arg9: memref<1x1x64xf32, #tpu.memory_space<vmem>>, %arg10: memref<1x64x128xbf16, #tpu.memory_space<vmem>>, %arg11: memref<1x1x128xf32, #tpu.memory_space<vmem>>, %arg12: memref<1x128x64xbf16, #tpu.memory_space<vmem>>, %arg13: memref<1x1x64xf32, #tpu.memory_space<vmem>>, %arg14: memref<1x1x64xf32, #tpu.memory_space<vmem>>, %arg15: memref<1x1x64xf32, #tpu.memory_space<vmem>>, %arg16: memref<1x8x64xbf16, #tpu.memory_space<vmem>>, %arg17: memref<8x64xf32, #tpu.memory_space<vmem>>) attributes {dimension_semantics = [#tpu.dimension_semantics<parallel>, #tpu.dimension_semantics<arbitrary>], iteration_bounds = array<i64: 2, 2>, scalar_prefetch = 0 : i64, scratch_operands = 1 : i64, tpu.core_type = #tpu.core_type<tc>, window_params = [{transform_indices = @transform_0, window_bounds = array<i64: 1, 8, 64>}, {transform_indices = @transform_1, window_bounds = array<i64: 1, 1, 8>}, {transform_indices = @transform_2, window_bounds = array<i64: 1, 64, 192>}, {transform_indices = @transform_3, window_bounds = array<i64: 1, 1, 192>}, {transform_indices = @transform_4, window_bounds = array<i64: 1, 64, 64>}, {transform_indices = @transform_5, window_bounds = array<i64: 1, 1, 64>}, {transform_indices = @transform_6, window_bounds = array<i64: 1, 1, 64>}, {transform_indices = @transform_7, window_bounds = array<i64: 1, 1, 64>}, {transform_indices = @transform_8, window_bounds = array<i64: 1, 64, 128>}, {transform_indices = @transform_9, window_bounds = array<i64: 1, 1, 128>}, {transform_indices = @transform_10, window_bounds = array<i64: 1, 128, 64>}, {transform_indices = @transform_11, window_bounds = array<i64: 1, 1, 64>}, {transform_indices = @transform_12, window_bounds = array<i64: 1, 1, 64>}, {transform_indices = @transform_13, window_bounds = array<i64: 1, 1, 64>}, {transform_indices = @transform_14, window_bounds = array<i64: 1, 8, 64>}]} {
    %c0_i32 = arith.constant 0 : i32
    %0 = arith.cmpi eq, %arg1, %c0_i32 : i32
    %1 = arith.extui %0 : i1 to i32
    %c0_i32_0 = arith.constant 0 : i32
    %2 = arith.cmpi ne, %1, %c0_i32_0 : i32
    scf.if %2 {
      %c0_84 = arith.constant 0 : index
      %c0_85 = arith.constant 0 : index
      %c0_86 = arith.constant 0 : index
      %215 = vector.load %arg2[%c0_84, %c0_85, %c0_86] : memref<1x8x64xbf16, #tpu.memory_space<vmem>>, vector<1x8x64xbf16>
      %216 = vector.shape_cast %215 : vector<1x8x64xbf16> to vector<8x64xbf16>
      %217 = arith.extf %216 : vector<8x64xbf16> to vector<8x64xf32>
      %c0_87 = arith.constant 0 : index
      %c0_88 = arith.constant 0 : index
      %218 = vector.load %arg17[%c0_87, %c0_88] : memref<8x64xf32, #tpu.memory_space<vmem>>, vector<8x64xf32>
      tpu.vector_store %arg17[%c0_87, %c0_88], %217 {strides = array<i32>} : memref<8x64xf32, #tpu.memory_space<vmem>>, vector<8x64xf32>,
    } else {
    }
    %c0 = arith.constant 0 : index
    %c0_1 = arith.constant 0 : index
    %3 = vector.load %arg17[%c0, %c0_1] : memref<8x64xf32, #tpu.memory_space<vmem>>, vector<8x64xf32>
    %4 = arith.truncf %3 : vector<8x64xf32> to vector<8x64xbf16>
    %c0_2 = arith.constant 0 : index
    %c0_3 = arith.constant 0 : index
    %c0_4 = arith.constant 0 : index
    %5 = vector.load %arg4[%c0_2, %c0_3, %c0_4] : memref<1x64x192xbf16, #tpu.memory_space<vmem>>, vector<1x64x192xbf16>
    %6 = vector.shape_cast %5 : vector<1x64x192xbf16> to vector<64x192xbf16>
    %cst = arith.constant dense<0.000000e+00> : vector<8x192xf32>
    %7 = tpu.matmul %4, %6, %cst {dimension_numbers = #tpu.dot_dimension_numbers<[1], [0], [0], [1], [0, 0, 1, 1], [], []>} : vector<8x64xbf16>, vector<64x192xbf16>, vector<8x192xf32> -> vector<8x192xf32>
    %c0_5 = arith.constant 0 : index
    %c0_6 = arith.constant 0 : index
    %c0_7 = arith.constant 0 : index
    %8 = vector.load %arg5[%c0_5, %c0_6, %c0_7] : memref<1x1x192xf32, #tpu.memory_space<vmem>>, vector<1x1x192xf32>
    %9 = vector.shape_cast %8 : vector<1x1x192xf32> to vector<1x192xf32>
    %10 = vector.broadcast %9 : vector<1x192xf32> to vector<8x192xf32>
    %11 = arith.addf %7, %10 : vector<8x192xf32>
    %c0_8 = arith.constant 0 : index
    %c0_9 = arith.constant 0 : index
    %c0_10 = arith.constant 0 : index
    %12 = vector.load %arg3[%c0_8, %c0_9, %c0_10] : memref<1x1x8xf32, #tpu.memory_space<vmem>>, vector<1x1x8xf32>
    %13 = vector.shape_cast %12 : vector<1x1x8xf32> to vector<1x8xf32>
    %cst_11 = arith.constant 1.000000e+00 : f32
    %14 = vector.broadcast %cst_11 : f32 to vector<1x8xf32>
    %15 = arith.subf %14, %13 : vector<1x8xf32>
    %cst_12 = arith.constant -1.000000e+09 : f32
    %16 = vector.broadcast %cst_12 : f32 to vector<1x8xf32>
    %17 = arith.mulf %15, %16 : vector<1x8xf32>
    %18 = vector.extract_strided_slice %11 {offsets = [0, 0], sizes = [8, 64], strides = [1, 1]} : vector<8x192xf32> to vector<8x64xf32>
    %cst_13 = arith.constant 2.500000e-01 : f32
    %19 = vector.broadcast %cst_13 : f32 to vector<8x64xf32>
    %20 = arith.mulf %18, %19 : vector<8x64xf32>
    %c0_14 = arith.constant 0 : index
    %c0_15 = arith.constant 0 : index
    %c0_16 = arith.constant 0 : index
    %21 = vector.load %arg6[%c0_14, %c0_15, %c0_16] : memref<1x64x64xbf16, #tpu.memory_space<vmem>>, vector<1x64x64xbf16>
    %22 = vector.shape_cast %21 : vector<1x64x64xbf16> to vector<64x64xbf16>
    %cst_17 = arith.constant 0.000000e+00 : f32
    %23 = vector.broadcast %cst_17 : f32 to vector<8x64xf32>
    %24 = vector.extract_strided_slice %20 {offsets = [0, 0], sizes = [8, 16], strides = [1, 1]} : vector<8x64xf32> to vector<8x16xf32>
    %25 = arith.truncf %24 : vector<8x16xf32> to vector<8x16xbf16>
    %26 = vector.extract_strided_slice %11 {offsets = [0, 64], sizes = [8, 16], strides = [1, 1]} : vector<8x192xf32> to vector<8x16xf32>
    %27 = arith.truncf %26 : vector<8x16xf32> to vector<8x16xbf16>
    %28 = vector.extract_strided_slice %11 {offsets = [0, 128], sizes = [8, 16], strides = [1, 1]} : vector<8x192xf32> to vector<8x16xf32>
    %29 = arith.truncf %28 : vector<8x16xf32> to vector<8x16xbf16>
    %cst_18 = arith.constant dense<0.000000e+00> : vector<8x8xf32>
    %30 = tpu.matmul %25, %27, %cst_18 {dimension_numbers = #tpu.dot_dimension_numbers<[1], [1], [0], [0], [0, 0, 1, 0], [], []>} : vector<8x16xbf16>, vector<8x16xbf16>, vector<8x8xf32> -> vector<8x8xf32>
    %31 = vector.broadcast %17 : vector<1x8xf32> to vector<8x8xf32>
    %32 = arith.addf %30, %31 : vector<8x8xf32>
    %cst_19 = arith.constant dense<0xFF800000> : vector<8xf32>
    %33 = vector.multi_reduction <maximumf>, %32, %cst_19 [1] : vector<8x8xf32> to vector<8xf32>
    %34 = vector.shape_cast %33 : vector<8xf32> to vector<8x1xf32>
    %35 = vector.broadcast %34 : vector<8x1xf32> to vector<8x8xf32>
    %36 = arith.subf %32, %35 : vector<8x8xf32>
    %37 = math.exp %36 : vector<8x8xf32>
    %cst_20 = arith.constant dense<0.000000e+00> : vector<8xf32>
    %38 = vector.multi_reduction <add>, %37, %cst_20 [1] : vector<8x8xf32> to vector<8xf32>
    %39 = vector.shape_cast %38 : vector<8xf32> to vector<8x1xf32>
    %40 = tpu.reciprocal %39 {approx = true} : vector<8x1xf32> -> vector<8x1xf32>
    %41 = vector.broadcast %40 : vector<8x1xf32> to vector<8x8xf32>
    %42 = arith.mulf %37, %41 : vector<8x8xf32>
    %43 = arith.truncf %42 : vector<8x8xf32> to vector<8x8xbf16>
    %cst_21 = arith.constant dense<0.000000e+00> : vector<8x16xf32>
    %44 = tpu.matmul %43, %29, %cst_21 {dimension_numbers = #tpu.dot_dimension_numbers<[1], [0], [0], [1], [0, 0, 1, 1], [], []>} : vector<8x8xbf16>, vector<8x16xbf16>, vector<8x16xf32> -> vector<8x16xf32>
    %45 = arith.truncf %44 : vector<8x16xf32> to vector<8x16xbf16>
    %46 = vector.extract_strided_slice %22 {offsets = [0, 0], sizes = [16, 64], strides = [1, 1]} : vector<64x64xbf16> to vector<16x64xbf16>
    %cst_22 = arith.constant dense<0.000000e+00> : vector<8x64xf32>
    %47 = tpu.matmul %45, %46, %cst_22 {dimension_numbers = #tpu.dot_dimension_numbers<[1], [0], [0], [1], [0, 0, 1, 1], [], []>} : vector<8x16xbf16>, vector<16x64xbf16>, vector<8x64xf32> -> vector<8x64xf32>
    %48 = arith.addf %23, %47 : vector<8x64xf32>
    %49 = vector.extract_strided_slice %20 {offsets = [0, 16], sizes = [8, 16], strides = [1, 1]} : vector<8x64xf32> to vector<8x16xf32>
    %50 = arith.truncf %49 : vector<8x16xf32> to vector<8x16xbf16>
    %51 = vector.extract_strided_slice %11 {offsets = [0, 80], sizes = [8, 16], strides = [1, 1]} : vector<8x192xf32> to vector<8x16xf32>
    %52 = arith.truncf %51 : vector<8x16xf32> to vector<8x16xbf16>
    %53 = vector.extract_strided_slice %11 {offsets = [0, 144], sizes = [8, 16], strides = [1, 1]} : vector<8x192xf32> to vector<8x16xf32>
    %54 = arith.truncf %53 : vector<8x16xf32> to vector<8x16xbf16>
    %cst_23 = arith.constant dense<0.000000e+00> : vector<8x8xf32>
    %55 = tpu.matmul %50, %52, %cst_23 {dimension_numbers = #tpu.dot_dimension_numbers<[1], [1], [0], [0], [0, 0, 1, 0], [], []>} : vector<8x16xbf16>, vector<8x16xbf16>, vector<8x8xf32> -> vector<8x8xf32>
    %56 = vector.broadcast %17 : vector<1x8xf32> to vector<8x8xf32>
    %57 = arith.addf %55, %56 : vector<8x8xf32>
    %cst_24 = arith.constant dense<0xFF800000> : vector<8xf32>
    %58 = vector.multi_reduction <maximumf>, %57, %cst_24 [1] : vector<8x8xf32> to vector<8xf32>
    %59 = vector.shape_cast %58 : vector<8xf32> to vector<8x1xf32>
    %60 = vector.broadcast %59 : vector<8x1xf32> to vector<8x8xf32>
    %61 = arith.subf %57, %60 : vector<8x8xf32>
    %62 = math.exp %61 : vector<8x8xf32>
    %cst_25 = arith.constant dense<0.000000e+00> : vector<8xf32>
    %63 = vector.multi_reduction <add>, %62, %cst_25 [1] : vector<8x8xf32> to vector<8xf32>
    %64 = vector.shape_cast %63 : vector<8xf32> to vector<8x1xf32>
    %65 = tpu.reciprocal %64 {approx = true} : vector<8x1xf32> -> vector<8x1xf32>
    %66 = vector.broadcast %65 : vector<8x1xf32> to vector<8x8xf32>
    %67 = arith.mulf %62, %66 : vector<8x8xf32>
    %68 = arith.truncf %67 : vector<8x8xf32> to vector<8x8xbf16>
    %cst_26 = arith.constant dense<0.000000e+00> : vector<8x16xf32>
    %69 = tpu.matmul %68, %54, %cst_26 {dimension_numbers = #tpu.dot_dimension_numbers<[1], [0], [0], [1], [0, 0, 1, 1], [], []>} : vector<8x8xbf16>, vector<8x16xbf16>, vector<8x16xf32> -> vector<8x16xf32>
    %70 = arith.truncf %69 : vector<8x16xf32> to vector<8x16xbf16>
    %71 = vector.extract_strided_slice %22 {offsets = [16, 0], sizes = [16, 64], strides = [1, 1]} : vector<64x64xbf16> to vector<16x64xbf16>
    %cst_27 = arith.constant dense<0.000000e+00> : vector<8x64xf32>
    %72 = tpu.matmul %70, %71, %cst_27 {dimension_numbers = #tpu.dot_dimension_numbers<[1], [0], [0], [1], [0, 0, 1, 1], [], []>} : vector<8x16xbf16>, vector<16x64xbf16>, vector<8x64xf32> -> vector<8x64xf32>
    %73 = arith.addf %48, %72 : vector<8x64xf32>
    %74 = vector.extract_strided_slice %20 {offsets = [0, 32], sizes = [8, 16], strides = [1, 1]} : vector<8x64xf32> to vector<8x16xf32>
    %75 = arith.truncf %74 : vector<8x16xf32> to vector<8x16xbf16>
    %76 = vector.extract_strided_slice %11 {offsets = [0, 96], sizes = [8, 16], strides = [1, 1]} : vector<8x192xf32> to vector<8x16xf32>
    %77 = arith.truncf %76 : vector<8x16xf32> to vector<8x16xbf16>
    %78 = vector.extract_strided_slice %11 {offsets = [0, 160], sizes = [8, 16], strides = [1, 1]} : vector<8x192xf32> to vector<8x16xf32>
    %79 = arith.truncf %78 : vector<8x16xf32> to vector<8x16xbf16>
    %cst_28 = arith.constant dense<0.000000e+00> : vector<8x8xf32>
    %80 = tpu.matmul %75, %77, %cst_28 {dimension_numbers = #tpu.dot_dimension_numbers<[1], [1], [0], [0], [0, 0, 1, 0], [], []>} : vector<8x16xbf16>, vector<8x16xbf16>, vector<8x8xf32> -> vector<8x8xf32>
    %81 = vector.broadcast %17 : vector<1x8xf32> to vector<8x8xf32>
    %82 = arith.addf %80, %81 : vector<8x8xf32>
    %cst_29 = arith.constant dense<0xFF800000> : vector<8xf32>
    %83 = vector.multi_reduction <maximumf>, %82, %cst_29 [1] : vector<8x8xf32> to vector<8xf32>
    %84 = vector.shape_cast %83 : vector<8xf32> to vector<8x1xf32>
    %85 = vector.broadcast %84 : vector<8x1xf32> to vector<8x8xf32>
    %86 = arith.subf %82, %85 : vector<8x8xf32>
    %87 = math.exp %86 : vector<8x8xf32>
    %cst_30 = arith.constant dense<0.000000e+00> : vector<8xf32>
    %88 = vector.multi_reduction <add>, %87, %cst_30 [1] : vector<8x8xf32> to vector<8xf32>
    %89 = vector.shape_cast %88 : vector<8xf32> to vector<8x1xf32>
    %90 = tpu.reciprocal %89 {approx = true} : vector<8x1xf32> -> vector<8x1xf32>
    %91 = vector.broadcast %90 : vector<8x1xf32> to vector<8x8xf32>
    %92 = arith.mulf %87, %91 : vector<8x8xf32>
    %93 = arith.truncf %92 : vector<8x8xf32> to vector<8x8xbf16>
    %cst_31 = arith.constant dense<0.000000e+00> : vector<8x16xf32>
    %94 = tpu.matmul %93, %79, %cst_31 {dimension_numbers = #tpu.dot_dimension_numbers<[1], [0], [0], [1], [0, 0, 1, 1], [], []>} : vector<8x8xbf16>, vector<8x16xbf16>, vector<8x16xf32> -> vector<8x16xf32>
    %95 = arith.truncf %94 : vector<8x16xf32> to vector<8x16xbf16>
    %96 = vector.extract_strided_slice %22 {offsets = [32, 0], sizes = [16, 64], strides = [1, 1]} : vector<64x64xbf16> to vector<16x64xbf16>
    %cst_32 = arith.constant dense<0.000000e+00> : vector<8x64xf32>
    %97 = tpu.matmul %95, %96, %cst_32 {dimension_numbers = #tpu.dot_dimension_numbers<[1], [0], [0], [1], [0, 0, 1, 1], [], []>} : vector<8x16xbf16>, vector<16x64xbf16>, vector<8x64xf32> -> vector<8x64xf32>
    %98 = arith.addf %73, %97 : vector<8x64xf32>
    %99 = vector.extract_strided_slice %20 {offsets = [0, 48], sizes = [8, 16], strides = [1, 1]} : vector<8x64xf32> to vector<8x16xf32>
    %100 = arith.truncf %99 : vector<8x16xf32> to vector<8x16xbf16>
    %101 = vector.extract_strided_slice %11 {offsets = [0, 112], sizes = [8, 16], strides = [1, 1]} : vector<8x192xf32> to vector<8x16xf32>
    %102 = arith.truncf %101 : vector<8x16xf32> to vector<8x16xbf16>
    %103 = vector.extract_strided_slice %11 {offsets = [0, 176], sizes = [8, 16], strides = [1, 1]} : vector<8x192xf32> to vector<8x16xf32>
    %104 = arith.truncf %103 : vector<8x16xf32> to vector<8x16xbf16>
    %cst_33 = arith.constant dense<0.000000e+00> : vector<8x8xf32>
    %105 = tpu.matmul %100, %102, %cst_33 {dimension_numbers = #tpu.dot_dimension_numbers<[1], [1], [0], [0], [0, 0, 1, 0], [], []>} : vector<8x16xbf16>, vector<8x16xbf16>, vector<8x8xf32> -> vector<8x8xf32>
    %106 = vector.broadcast %17 : vector<1x8xf32> to vector<8x8xf32>
    %107 = arith.addf %105, %106 : vector<8x8xf32>
    %cst_34 = arith.constant dense<0xFF800000> : vector<8xf32>
    %108 = vector.multi_reduction <maximumf>, %107, %cst_34 [1] : vector<8x8xf32> to vector<8xf32>
    %109 = vector.shape_cast %108 : vector<8xf32> to vector<8x1xf32>
    %110 = vector.broadcast %109 : vector<8x1xf32> to vector<8x8xf32>
    %111 = arith.subf %107, %110 : vector<8x8xf32>
    %112 = math.exp %111 : vector<8x8xf32>
    %cst_35 = arith.constant dense<0.000000e+00> : vector<8xf32>
    %113 = vector.multi_reduction <add>, %112, %cst_35 [1] : vector<8x8xf32> to vector<8xf32>
    %114 = vector.shape_cast %113 : vector<8xf32> to vector<8x1xf32>
    %115 = tpu.reciprocal %114 {approx = true} : vector<8x1xf32> -> vector<8x1xf32>
    %116 = vector.broadcast %115 : vector<8x1xf32> to vector<8x8xf32>
    %117 = arith.mulf %112, %116 : vector<8x8xf32>
    %118 = arith.truncf %117 : vector<8x8xf32> to vector<8x8xbf16>
    %cst_36 = arith.constant dense<0.000000e+00> : vector<8x16xf32>
    %119 = tpu.matmul %118, %104, %cst_36 {dimension_numbers = #tpu.dot_dimension_numbers<[1], [0], [0], [1], [0, 0, 1, 1], [], []>} : vector<8x8xbf16>, vector<8x16xbf16>, vector<8x16xf32> -> vector<8x16xf32>
    %120 = arith.truncf %119 : vector<8x16xf32> to vector<8x16xbf16>
    %121 = vector.extract_strided_slice %22 {offsets = [48, 0], sizes = [16, 64], strides = [1, 1]} : vector<64x64xbf16> to vector<16x64xbf16>
    %cst_37 = arith.constant dense<0.000000e+00> : vector<8x64xf32>
    %122 = tpu.matmul %120, %121, %cst_37 {dimension_numbers = #tpu.dot_dimension_numbers<[1], [0], [0], [1], [0, 0, 1, 1], [], []>} : vector<8x16xbf16>, vector<16x64xbf16>, vector<8x64xf32> -> vector<8x64xf32>
    %123 = arith.addf %98, %122 : vector<8x64xf32>
    %c0_38 = arith.constant 0 : index
    %c0_39 = arith.constant 0 : index
    %c0_40 = arith.constant 0 : index
    %124 = vector.load %arg7[%c0_38, %c0_39, %c0_40] : memref<1x1x64xf32, #tpu.memory_space<vmem>>, vector<1x1x64xf32>
    %125 = vector.shape_cast %124 : vector<1x1x64xf32> to vector<1x64xf32>
    %126 = vector.broadcast %125 : vector<1x64xf32> to vector<8x64xf32>
    %127 = arith.addf %123, %126 : vector<8x64xf32>
    %128 = arith.addf %127, %3 : vector<8x64xf32>
    %c0_41 = arith.constant 0 : index
    %c0_42 = arith.constant 0 : index
    %c0_43 = arith.constant 0 : index
    %129 = vector.load %arg8[%c0_41, %c0_42, %c0_43] : memref<1x1x64xf32, #tpu.memory_space<vmem>>, vector<1x1x64xf32>
    %130 = vector.shape_cast %129 : vector<1x1x64xf32> to vector<1x64xf32>
    %c0_44 = arith.constant 0 : index
    %c0_45 = arith.constant 0 : index
    %c0_46 = arith.constant 0 : index
    %131 = vector.load %arg9[%c0_44, %c0_45, %c0_46] : memref<1x1x64xf32, #tpu.memory_space<vmem>>, vector<1x1x64xf32>
    %132 = vector.shape_cast %131 : vector<1x1x64xf32> to vector<1x64xf32>
    %cst_47 = arith.constant dense<0.000000e+00> : vector<8xf32>
    %133 = vector.multi_reduction <add>, %128, %cst_47 [1] : vector<8x64xf32> to vector<8xf32>
    %134 = vector.shape_cast %133 : vector<8xf32> to vector<8x1xf32>
    %cst_48 = arith.constant 6.400000e+01 : f32
    %135 = vector.broadcast %cst_48 : f32 to vector<8x1xf32>
    %136 = arith.divf %134, %135 : vector<8x1xf32>
    %137 = vector.broadcast %136 : vector<8x1xf32> to vector<8x64xf32>
    %138 = arith.subf %128, %137 : vector<8x64xf32>
    %139 = arith.mulf %138, %138 : vector<8x64xf32>
    %cst_49 = arith.constant dense<0.000000e+00> : vector<8xf32>
    %140 = vector.multi_reduction <add>, %139, %cst_49 [1] : vector<8x64xf32> to vector<8xf32>
    %141 = vector.shape_cast %140 : vector<8xf32> to vector<8x1xf32>
    %cst_50 = arith.constant 6.400000e+01 : f32
    %142 = vector.broadcast %cst_50 : f32 to vector<8x1xf32>
    %143 = arith.divf %141, %142 : vector<8x1xf32>
    %144 = vector.broadcast %136 : vector<8x1xf32> to vector<8x64xf32>
    %145 = arith.subf %128, %144 : vector<8x64xf32>
    %cst_51 = arith.constant 9.99999996E-13 : f32
    %146 = vector.broadcast %cst_51 : f32 to vector<8x1xf32>
    %147 = arith.addf %143, %146 : vector<8x1xf32>
    %148 = math.rsqrt %147 : vector<8x1xf32>
    %149 = vector.broadcast %148 : vector<8x1xf32> to vector<8x64xf32>
    %150 = arith.mulf %145, %149 : vector<8x64xf32>
    %151 = vector.broadcast %130 : vector<1x64xf32> to vector<8x64xf32>
    %152 = arith.mulf %150, %151 : vector<8x64xf32>
    %153 = vector.broadcast %132 : vector<1x64xf32> to vector<8x64xf32>
    %154 = arith.addf %152, %153 : vector<8x64xf32>
    %155 = arith.truncf %154 : vector<8x64xf32> to vector<8x64xbf16>
    %c0_52 = arith.constant 0 : index
    %c0_53 = arith.constant 0 : index
    %c0_54 = arith.constant 0 : index
    %156 = vector.load %arg10[%c0_52, %c0_53, %c0_54] : memref<1x64x128xbf16, #tpu.memory_space<vmem>>, vector<1x64x128xbf16>
    %157 = vector.shape_cast %156 : vector<1x64x128xbf16> to vector<64x128xbf16>
    %cst_55 = arith.constant dense<0.000000e+00> : vector<8x128xf32>
    %158 = tpu.matmul %155, %157, %cst_55 {dimension_numbers = #tpu.dot_dimension_numbers<[1], [0], [0], [1], [0, 0, 1, 1], [], []>} : vector<8x64xbf16>, vector<64x128xbf16>, vector<8x128xf32> -> vector<8x128xf32>
    %c0_56 = arith.constant 0 : index
    %c0_57 = arith.constant 0 : index
    %c0_58 = arith.constant 0 : index
    %159 = vector.load %arg11[%c0_56, %c0_57, %c0_58] : memref<1x1x128xf32, #tpu.memory_space<vmem>>, vector<1x1x128xf32>
    %160 = vector.shape_cast %159 : vector<1x1x128xf32> to vector<1x128xf32>
    %161 = vector.broadcast %160 : vector<1x128xf32> to vector<8x128xf32>
    %162 = arith.addf %158, %161 : vector<8x128xf32>
    %cst_59 = arith.constant 5.000000e-01 : f32
    %163 = vector.broadcast %cst_59 : f32 to vector<8x128xf32>
    %164 = arith.mulf %163, %162 : vector<8x128xf32>
    %cst_60 = arith.constant 4.471500e-02 : f32
    %165 = vector.broadcast %cst_60 : f32 to vector<8x128xf32>
    %166 = arith.mulf %165, %162 : vector<8x128xf32>
    %167 = arith.mulf %166, %162 : vector<8x128xf32>
    %168 = arith.mulf %167, %162 : vector<8x128xf32>
    %169 = arith.addf %162, %168 : vector<8x128xf32>
    %cst_61 = arith.constant 0.797884583 : f32
    %170 = vector.broadcast %cst_61 : f32 to vector<8x128xf32>
    %171 = arith.mulf %170, %169 : vector<8x128xf32>
    %172 = math.tanh %171 : vector<8x128xf32>
    %cst_62 = arith.constant 1.000000e+00 : f32
    %173 = vector.broadcast %cst_62 : f32 to vector<8x128xf32>
    %174 = arith.addf %173, %172 : vector<8x128xf32>
    %175 = arith.mulf %164, %174 : vector<8x128xf32>
    %176 = arith.truncf %175 : vector<8x128xf32> to vector<8x128xbf16>
    %c0_63 = arith.constant 0 : index
    %c0_64 = arith.constant 0 : index
    %c0_65 = arith.constant 0 : index
    %177 = vector.load %arg12[%c0_63, %c0_64, %c0_65] : memref<1x128x64xbf16, #tpu.memory_space<vmem>>, vector<1x128x64xbf16>
    %178 = vector.shape_cast %177 : vector<1x128x64xbf16> to vector<128x64xbf16>
    %cst_66 = arith.constant dense<0.000000e+00> : vector<8x64xf32>
    %179 = tpu.matmul %176, %178, %cst_66 {dimension_numbers = #tpu.dot_dimension_numbers<[1], [0], [0], [1], [0, 0, 1, 1], [], []>} : vector<8x128xbf16>, vector<128x64xbf16>, vector<8x64xf32> -> vector<8x64xf32>
    %c0_67 = arith.constant 0 : index
    %c0_68 = arith.constant 0 : index
    %c0_69 = arith.constant 0 : index
    %180 = vector.load %arg13[%c0_67, %c0_68, %c0_69] : memref<1x1x64xf32, #tpu.memory_space<vmem>>, vector<1x1x64xf32>
    %181 = vector.shape_cast %180 : vector<1x1x64xf32> to vector<1x64xf32>
    %182 = vector.broadcast %181 : vector<1x64xf32> to vector<8x64xf32>
    %183 = arith.addf %179, %182 : vector<8x64xf32>
    %184 = arith.addf %183, %154 : vector<8x64xf32>
    %c0_70 = arith.constant 0 : index
    %c0_71 = arith.constant 0 : index
    %c0_72 = arith.constant 0 : index
    %185 = vector.load %arg14[%c0_70, %c0_71, %c0_72] : memref<1x1x64xf32, #tpu.memory_space<vmem>>, vector<1x1x64xf32>
    %186 = vector.shape_cast %185 : vector<1x1x64xf32> to vector<1x64xf32>
    %c0_73 = arith.constant 0 : index
    %c0_74 = arith.constant 0 : index
    %c0_75 = arith.constant 0 : index
    %187 = vector.load %arg15[%c0_73, %c0_74, %c0_75] : memref<1x1x64xf32, #tpu.memory_space<vmem>>, vector<1x1x64xf32>
    %188 = vector.shape_cast %187 : vector<1x1x64xf32> to vector<1x64xf32>
    %cst_76 = arith.constant dense<0.000000e+00> : vector<8xf32>
    %189 = vector.multi_reduction <add>, %184, %cst_76 [1] : vector<8x64xf32> to vector<8xf32>
    %190 = vector.shape_cast %189 : vector<8xf32> to vector<8x1xf32>
    %cst_77 = arith.constant 6.400000e+01 : f32
    %191 = vector.broadcast %cst_77 : f32 to vector<8x1xf32>
    %192 = arith.divf %190, %191 : vector<8x1xf32>
    %193 = vector.broadcast %192 : vector<8x1xf32> to vector<8x64xf32>
    %194 = arith.subf %184, %193 : vector<8x64xf32>
    %195 = arith.mulf %194, %194 : vector<8x64xf32>
    %cst_78 = arith.constant dense<0.000000e+00> : vector<8xf32>
    %196 = vector.multi_reduction <add>, %195, %cst_78 [1] : vector<8x64xf32> to vector<8xf32>
    %197 = vector.shape_cast %196 : vector<8xf32> to vector<8x1xf32>
    %cst_79 = arith.constant 6.400000e+01 : f32
    %198 = vector.broadcast %cst_79 : f32 to vector<8x1xf32>
    %199 = arith.divf %197, %198 : vector<8x1xf32>
    %200 = vector.broadcast %192 : vector<8x1xf32> to vector<8x64xf32>
    %201 = arith.subf %184, %200 : vector<8x64xf32>
    %cst_80 = arith.constant 9.99999996E-13 : f32
    %202 = vector.broadcast %cst_80 : f32 to vector<8x1xf32>
    %203 = arith.addf %199, %202 : vector<8x1xf32>
    %204 = math.rsqrt %203 : vector<8x1xf32>
    %205 = vector.broadcast %204 : vector<8x1xf32> to vector<8x64xf32>
    %206 = arith.mulf %201, %205 : vector<8x64xf32>
    %207 = vector.broadcast %186 : vector<1x64xf32> to vector<8x64xf32>
    %208 = arith.mulf %206, %207 : vector<8x64xf32>
    %209 = vector.broadcast %188 : vector<1x64xf32> to vector<8x64xf32>
    %210 = arith.addf %208, %209 : vector<8x64xf32>
    %c0_81 = arith.constant 0 : index
    %c0_82 = arith.constant 0 : index
    %211 = vector.load %arg17[%c0_81, %c0_82] : memref<8x64xf32, #tpu.memory_space<vmem>>, vector<8x64xf32>
    tpu.vector_store %arg17[%c0_81, %c0_82], %210 {strides = array<i32>} : memref<8x64xf32, #tpu.memory_space<vmem>>, vector<8x64xf32>,
    %c1_i32 = arith.constant 1 : i32
    %212 = arith.cmpi eq, %arg1, %c1_i32 : i32
    %213 = arith.extui %212 : i1 to i32
    %c0_i32_83 = arith.constant 0 : i32
    %214 = arith.cmpi ne, %213, %c0_i32_83 : i32
    scf.if %214 {
      %215 = arith.truncf %210 : vector<8x64xf32> to vector<8x64xbf16>
      %c0_84 = arith.constant 0 : index
      %c0_85 = arith.constant 0 : index
      %c0_86 = arith.constant 0 : index
      %216 = vector.load %arg16[%c0_84, %c0_85, %c0_86] : memref<1x8x64xbf16, #tpu.memory_space<vmem>>, vector<1x8x64xbf16>
      %217 = vector.shape_cast %216 : vector<1x8x64xbf16> to vector<8x64xbf16>
      %218 = vector.shape_cast %215 : vector<8x64xbf16> to vector<1x8x64xbf16>
      tpu.vector_store %arg16[%c0_84, %c0_85, %c0_86], %218 {strides = array<i32>} : memref<1x8x64xbf16, #tpu.memory_space<vmem>>, vector<1x8x64xbf16>,
    } else {
    }
    return
  }
  func.func @transform_0(%arg0: i32, %arg1: i32) -> (i32, i32, i32) {
    %c0_i32 = arith.constant 0 : i32
    %c0_i32_0 = arith.constant 0 : i32
    %c0_i32_1 = arith.constant 0 : i32
    return %arg0, %c0_i32, %c0_i32_0 : i32, i32, i32
  }
  func.func @transform_1(%arg0: i32, %arg1: i32) -> (i32, i32, i32) {
    %c0_i32 = arith.constant 0 : i32
    %c0_i32_0 = arith.constant 0 : i32
    %c0_i32_1 = arith.constant 0 : i32
    return %arg0, %c0_i32, %c0_i32_0 : i32, i32, i32
  }
  func.func @transform_2(%arg0: i32, %arg1: i32) -> (i32, i32, i32) {
    %c0_i32 = arith.constant 0 : i32
    %c0_i32_0 = arith.constant 0 : i32
    %c0_i32_1 = arith.constant 0 : i32
    return %arg1, %c0_i32, %c0_i32_0 : i32, i32, i32
  }
  func.func @transform_3(%arg0: i32, %arg1: i32) -> (i32, i32, i32) {
    %c0_i32 = arith.constant 0 : i32
    %c0_i32_0 = arith.constant 0 : i32
    %c0_i32_1 = arith.constant 0 : i32
    return %arg1, %c0_i32, %c0_i32_0 : i32, i32, i32
  }
  func.func @transform_4(%arg0: i32, %arg1: i32) -> (i32, i32, i32) {
    %c0_i32 = arith.constant 0 : i32
    %c0_i32_0 = arith.constant 0 : i32
    %c0_i32_1 = arith.constant 0 : i32
    return %arg1, %c0_i32, %c0_i32_0 : i32, i32, i32
  }
  func.func @transform_5(%arg0: i32, %arg1: i32) -> (i32, i32, i32) {
    %c0_i32 = arith.constant 0 : i32
    %c0_i32_0 = arith.constant 0 : i32
    %c0_i32_1 = arith.constant 0 : i32
    return %arg1, %c0_i32, %c0_i32_0 : i32, i32, i32
  }
  func.func @transform_6(%arg0: i32, %arg1: i32) -> (i32, i32, i32) {
    %c0_i32 = arith.constant 0 : i32
    %c0_i32_0 = arith.constant 0 : i32
    %c0_i32_1 = arith.constant 0 : i32
    return %arg1, %c0_i32, %c0_i32_0 : i32, i32, i32
  }
  func.func @transform_7(%arg0: i32, %arg1: i32) -> (i32, i32, i32) {
    %c0_i32 = arith.constant 0 : i32
    %c0_i32_0 = arith.constant 0 : i32
    %c0_i32_1 = arith.constant 0 : i32
    return %arg1, %c0_i32, %c0_i32_0 : i32, i32, i32
  }
  func.func @transform_8(%arg0: i32, %arg1: i32) -> (i32, i32, i32) {
    %c0_i32 = arith.constant 0 : i32
    %c0_i32_0 = arith.constant 0 : i32
    %c0_i32_1 = arith.constant 0 : i32
    return %arg1, %c0_i32, %c0_i32_0 : i32, i32, i32
  }
  func.func @transform_9(%arg0: i32, %arg1: i32) -> (i32, i32, i32) {
    %c0_i32 = arith.constant 0 : i32
    %c0_i32_0 = arith.constant 0 : i32
    %c0_i32_1 = arith.constant 0 : i32
    return %arg1, %c0_i32, %c0_i32_0 : i32, i32, i32
  }
  func.func @transform_10(%arg0: i32, %arg1: i32) -> (i32, i32, i32) {
    %c0_i32 = arith.constant 0 : i32
    %c0_i32_0 = arith.constant 0 : i32
    %c0_i32_1 = arith.constant 0 : i32
    return %arg1, %c0_i32, %c0_i32_0 : i32, i32, i32
  }
  func.func @transform_11(%arg0: i32, %arg1: i32) -> (i32, i32, i32) {
    %c0_i32 = arith.constant 0 : i32
    %c0_i32_0 = arith.constant 0 : i32
    %c0_i32_1 = arith.constant 0 : i32
    return %arg1, %c0_i32, %c0_i32_0 : i32, i32, i32
  }
  func.func @transform_12(%arg0: i32, %arg1: i32) -> (i32, i32, i32) {
    %c0_i32 = arith.constant 0 : i32
    %c0_i32_0 = arith.constant 0 : i32
    %c0_i32_1 = arith.constant 0 : i32
    return %arg1, %c0_i32, %c0_i32_0 : i32, i32, i32
  }
  func.func @transform_13(%arg0: i32, %arg1: i32) -> (i32, i32, i32) {
    %c0_i32 = arith.constant 0 : i32
    %c0_i32_0 = arith.constant 0 : i32
    %c0_i32_1 = arith.constant 0 : i32
    return %arg1, %c0_i32, %c0_i32_0 : i32, i32, i32
  }
  func.func @transform_14(%arg0: i32, %arg1: i32) -> (i32, i32, i32) {
    %c0_i32 = arith.constant 0 : i32
    %c0_i32_0 = arith.constant 0 : i32
    %c0_i32_1 = arith.constant 0 : i32
    return %arg0, %c0_i32, %c0_i32_0 : i32, i32, i32
  }
}

module attributes {stable_mosaic.version = 11 : i64} {
  func.func @_layer_norm_kernel(%arg0: i32, %arg1: memref<16x64xf32, #tpu.memory_space<vmem>>, %arg2: memref<1x64xf32, #tpu.memory_space<vmem>>, %arg3: memref<1x64xf32, #tpu.memory_space<vmem>>, %arg4: memref<16x64xbf16, #tpu.memory_space<vmem>>) attributes {dimension_semantics = [#tpu.dimension_semantics<parallel>], iteration_bounds = array<i64: 1>, scalar_prefetch = 0 : i64, scratch_operands = 0 : i64, tpu.core_type = #tpu.core_type<tc>, window_params = [{transform_indices = @transform_0, window_bounds = array<i64: 16, 64>}, {pipeline_mode = #tpu.pipeline_mode<synchronous>, transform_indices = @transform_1, window_bounds = array<i64: 1, 64>}, {pipeline_mode = #tpu.pipeline_mode<synchronous>, transform_indices = @transform_2, window_bounds = array<i64: 1, 64>}, {transform_indices = @transform_3, window_bounds = array<i64: 16, 64>}]} {
    %c0 = arith.constant 0 : index
    %c0_0 = arith.constant 0 : index
    %0 = vector.load %arg1[%c0, %c0_0] : memref<16x64xf32, #tpu.memory_space<vmem>>, vector<16x64xf32>
    %c0_1 = arith.constant 0 : index
    %c0_2 = arith.constant 0 : index
    %1 = vector.load %arg2[%c0_1, %c0_2] : memref<1x64xf32, #tpu.memory_space<vmem>>, vector<1x64xf32>
    %c0_3 = arith.constant 0 : index
    %c0_4 = arith.constant 0 : index
    %2 = vector.load %arg3[%c0_3, %c0_4] : memref<1x64xf32, #tpu.memory_space<vmem>>, vector<1x64xf32>
    %cst = arith.constant dense<0.000000e+00> : vector<16xf32>
    %3 = vector.multi_reduction <add>, %0, %cst [1] : vector<16x64xf32> to vector<16xf32>
    %4 = vector.shape_cast %3 : vector<16xf32> to vector<16x1xf32>
    %cst_5 = arith.constant 6.400000e+01 : f32
    %5 = vector.broadcast %cst_5 : f32 to vector<16x1xf32>
    %6 = arith.divf %4, %5 : vector<16x1xf32>
    %7 = vector.broadcast %6 : vector<16x1xf32> to vector<16x64xf32>
    %8 = arith.subf %0, %7 : vector<16x64xf32>
    %9 = arith.mulf %8, %8 : vector<16x64xf32>
    %cst_6 = arith.constant dense<0.000000e+00> : vector<16xf32>
    %10 = vector.multi_reduction <add>, %9, %cst_6 [1] : vector<16x64xf32> to vector<16xf32>
    %11 = vector.shape_cast %10 : vector<16xf32> to vector<16x1xf32>
    %cst_7 = arith.constant 6.400000e+01 : f32
    %12 = vector.broadcast %cst_7 : f32 to vector<16x1xf32>
    %13 = arith.divf %11, %12 : vector<16x1xf32>
    %14 = vector.broadcast %6 : vector<16x1xf32> to vector<16x64xf32>
    %15 = arith.subf %0, %14 : vector<16x64xf32>
    %cst_8 = arith.constant 9.99999996E-13 : f32
    %16 = vector.broadcast %cst_8 : f32 to vector<16x1xf32>
    %17 = arith.addf %13, %16 : vector<16x1xf32>
    %18 = math.rsqrt %17 : vector<16x1xf32>
    %19 = vector.broadcast %18 : vector<16x1xf32> to vector<16x64xf32>
    %20 = arith.mulf %15, %19 : vector<16x64xf32>
    %21 = vector.broadcast %1 : vector<1x64xf32> to vector<16x64xf32>
    %22 = arith.mulf %20, %21 : vector<16x64xf32>
    %23 = vector.broadcast %2 : vector<1x64xf32> to vector<16x64xf32>
    %24 = arith.addf %22, %23 : vector<16x64xf32>
    %25 = arith.truncf %24 : vector<16x64xf32> to vector<16x64xbf16>
    %c0_9 = arith.constant 0 : index
    %c0_10 = arith.constant 0 : index
    %26 = vector.load %arg4[%c0_9, %c0_10] : memref<16x64xbf16, #tpu.memory_space<vmem>>, vector<16x64xbf16>
    tpu.vector_store %arg4[%c0_9, %c0_10], %25 {strides = array<i32>} : memref<16x64xbf16, #tpu.memory_space<vmem>>, vector<16x64xbf16>,
    return
  }
  func.func @transform_0(%arg0: i32) -> (i32, i32) {
    %c0_i32 = arith.constant 0 : i32
    %c0_i32_0 = arith.constant 0 : i32
    return %arg0, %c0_i32 : i32, i32
  }
  func.func @transform_1(%arg0: i32) -> (i32, i32) {
    %c0_i32 = arith.constant 0 : i32
    %c0_i32_0 = arith.constant 0 : i32
    %c0_i32_1 = arith.constant 0 : i32
    return %c0_i32, %c0_i32_0 : i32, i32
  }
  func.func @transform_2(%arg0: i32) -> (i32, i32) {
    %c0_i32 = arith.constant 0 : i32
    %c0_i32_0 = arith.constant 0 : i32
    %c0_i32_1 = arith.constant 0 : i32
    return %c0_i32, %c0_i32_0 : i32, i32
  }
  func.func @transform_3(%arg0: i32) -> (i32, i32) {
    %c0_i32 = arith.constant 0 : i32
    %c0_i32_0 = arith.constant 0 : i32
    return %arg0, %c0_i32 : i32, i32
  }
}

</mosaic_0001>

<llo_original>
// kernel: squeeze.2
$region0: #{squeeze.2}
  %s0 = inlined_call_operand.vmem [shape: f32[16], index: 0, kind: input, shape index: {}]
  %s1 = inlined_call_operand.hbm [shape: f32[2,8], index: 1, kind: output, shape index: {}]
  $region1: #{squeeze.2} parent=0
    #allocation0 [shape = 'u8[1024]{0}', space=vmem, size = 0x400, scoped, tag = 'operand span for operand 1']
    #allocation1 [shape = 's32[1]{0}', space=sflag, size = 0x4, scoped, tag = 'scoped memory for squeeze.2']
    #allocation2 [shape = 'u8[4096]{0}', space=vmem, size = 0x1000, scoped, tag = 'scoped mem for output reshape']
    #allocation3 [shape = 'u8[4096]{0}', space=vmem, size = 0x1000, scoped, tag = 'scoped mem for input reshape']
    %2 = vsyncpa [#allocation1], 0
    %s4 = sshllo.u32 0, 1
    %v5 = vld [vmem:[%s0] sm:%s4]
    %6 = vst [vmem:[#allocation3] sm:%s4] %v5
    %v7 = vld [vmem:[#allocation3] sm:$0x1]
    %vm8 = vcmask 64512
    %9 = vst.msk [vmem:[#allocation2] sm:$0x1] %vm8, %v7
    %v10 = vld [vmem:[#allocation3] sm:$0x1]
    %11 = vrot.lane.b32.xlu0 %v10, 120
    %v12 = vpop.permute.xlu0 %11
    %vm13 = vcmask 64512
    %s14 = scalar_lea.vmem [#allocation2], 1
    %15 = vst.msk [vmem:[%s14] sm:$0x1] %vm13, %v12
    %s17 = sshllo.u32 0, 2
    %v19 = vld [vmem:[#allocation2] sm:%s17]
    %s20 = sshllo.u32 0, 2
    %21 = vst [vmem:[#allocation0] sm:%s20] %v19
    %s23 = ssub.s32 32, 32
    %24 = vsyncadd [#allocation1], %s23
    %s26 = sshll.u32 [#allocation0], 4
    %s27 = int_to_ptr.vmem [resolvable:$true] %s26
    %29 = dma.vmem_to_hbm [thread:$0]  %s27, 32, %s1, [#allocation1]
    %30 = dma.done [#allocation1], 32
    %31 = vsyncpa [#allocation1], 1

// kernel: bert_base_uncased_tweet_forward.3
$region0: #{bert_base_uncased_tweet_forward.3}
  #allocation0 [shape = 'u32[]', space=smem, size = 0x4, offset = 0x4, fixed_abs, tag = 'smem constant byte address 0x4 - core index']
  #allocation1 [shape = 'u32[144,128]{1,0:T(1,128)}', space=vmem, size = 0x12000, scoped, tag = 'internal scratch']
  %s0 = inlined_call_operand.vmem [shape: f32[16,64], index: 0, kind: input, shape index: {}]
  %s1 = inlined_call_operand.vmem [shape: f32[1,64], index: 1, kind: input, shape index: {}]
  %s2 = inlined_call_operand.vmem [shape: f32[1,64], index: 2, kind: input, shape index: {}]
  %s3 = inlined_call_operand.vmem [shape: bf16[16,64], index: 3, kind: output, shape index: {}]
  %s4 = sld [smem:[#allocation0]]
  $region22: #{bert_base_uncased_tweet_forward.3} parent=0
    _
  %s6 = ssub.s32 1, %s4
  %s7 = scalar_select 0, %s6, %s4
  // Predicated region
  $region2: #{bert_base_uncased_tweet_forward.3} parent=0 // pred_check
    _
  $region3: #{bert_base_uncased_tweet_forward.3} parent=0 // pred_check_branch
    %9 = sbr.rel (0) target = $region5
  $region4: #{bert_base_uncased_tweet_forward.3} parent=0 // pred_region
    _
  $region5: #{bert_base_uncased_tweet_forward.3} parent=0 // pred_fallthru
    _
  // Predicated region
  $region6: #{bert_base_uncased_tweet_forward.3} parent=0 // pred_check
    _
  $region7: #{bert_base_uncased_tweet_forward.3} parent=0 // pred_check_branch
    %11 = sbr.rel (0) target = $region9
  $region8: #{bert_base_uncased_tweet_forward.3} parent=0 // pred_region
    _
  $region9: #{bert_base_uncased_tweet_forward.3} parent=0 // pred_fallthru
    _
  // Predicated region
  $region10: #{bert_base_uncased_tweet_forward.3} parent=0 // pred_check
    _
  $region11: #{bert_base_uncased_tweet_forward.3} parent=0 // pred_check_branch
    %13 = sbr.rel (0) target = $region13
  $region12: #{bert_base_uncased_tweet_forward.3} parent=0 // pred_region
    _
  $region13: #{bert_base_uncased_tweet_forward.3} parent=0 // pred_fallthru
    _
  %v14 = vld [vmem:[%s0] sm:$0xff]
  %v15 = vld [vmem:[%s0 + $0x8] sm:$0xff]
  %v16 = vld [vmem:[%s1] sm:$0x1]
  %v17 = vld [vmem:[%s2] sm:$0x1]
  %vm18 = vcmask 523264
  %v19 = vsel %vm18, %v14, 0.0
  %20 = vadd.xlane.f32.xlu0 %v19
  %v21 = vpop.xlane.xlu0 %20
  %v22 = vsel %vm18, %v15, 0.0
  %23 = vadd.xlane.f32.xlu0 %v22
  %v24 = vpop.xlane.xlu0 %23
  %v25 = vrcp.pop 64.0
  %v26 = vmul.f32 %v21, %v25
  %v27 = vmul.f32 %v24, %v25
  %v28 = vsub.f32 %v14, %v26
  %v29 = vsub.f32 %v15, %v27
  %v30 = vmul.f32 %v28, %v28
  %v31 = vmul.f32 %v29, %v29
  %v32 = vsel %vm18, %v30, 0.0
  %33 = vadd.xlane.f32.xlu0 %v32
  %v34 = vpop.xlane.xlu0 %33
  %v35 = vsel %vm18, %v31, 0.0
  %36 = vadd.xlane.f32.xlu0 %v35
  %v37 = vpop.xlane.xlu0 %36
  %v38 = vmul.f32 %v34, %v25
  %v39 = vmul.f32 %v37, %v25
  %v40 = vadd.f32 %v38, 1e-12
  %v41 = vadd.f32 %v39, 1e-12
  %v42 = vrsqrt.pop %v40
  %v43 = vrsqrt.pop %v41
  %v44 = vmul.f32 %v28, %v42
  %v45 = vmul.f32 %v29, %v43
  %v47 = vlaneseq
  %v48 = vshrl.u32 %v47, 7
  %v49 = vsub.s32 0, %v48
  %v50 = vrot.slane %v16, %v49
  %v52 = vmul.f32 %v44, %v50
  %v53 = vmul.f32 %v45, %v50
  %v55 = vlaneseq
  %v56 = vshrl.u32 %v55, 7
  %v57 = vsub.s32 0, %v56
  %v58 = vrot.slane %v17, %v57
  %v60 = vadd.f32 %v52, %v58
  %v61 = vadd.f32 %v53, %v58
  %v62 = vpack.c.bf16 %v61, %v60
  %v64 = vunpack.c.l.b16 %v62
  %v65 = vunpack.c.h.b16 %v62
  %v66 = vpack.c.b16 %v64, %v64
  %v67 = vpack.c.b16 %v65, %v65
  %vm70 = vcmask 519168
  %71 = vst.msk [vmem:[%s3] sm:$0xf] %vm70, %v66
  %72 = vst.msk [vmem:[%s3 + $0x4] sm:$0xf] %vm70, %v67
  // Predicated region
  $region14: #{bert_base_uncased_tweet_forward.3} parent=0 // pred_check
    _
  $region15: #{bert_base_uncased_tweet_forward.3} parent=0 // pred_check_branch
    %74 = sbr.rel (0) target = $region17
  $region16: #{bert_base_uncased_tweet_forward.3} parent=0 // pred_region
    _
  $region17: #{bert_base_uncased_tweet_forward.3} parent=0 // pred_fallthru
    _
  // Predicated region
  $region18: #{bert_base_uncased_tweet_forward.3} parent=0 // pred_check
    _
  $region19: #{bert_base_uncased_tweet_forward.3} parent=0 // pred_check_branch
    %76 = sbr.rel (0) target = $region21
  $region20: #{bert_base_uncased_tweet_forward.3} parent=0 // pred_region
    _
  $region21: #{bert_base_uncased_tweet_forward.3} parent=0 // pred_fallthru
    _

// kernel: bert_base_uncased_tweet_forward.5
$region0: #{bert_base_uncased_tweet_forward.5}
  #allocation0 [shape = 'u32[]', space=smem, size = 0x4, offset = 0x4, fixed_abs, tag = 'smem constant byte address 0x4 - core index']
  #allocation1 [shape = 'u32[144,128]{1,0:T(1,128)}', space=vmem, size = 0x12000, scoped, tag = 'internal scratch']
  %s0 = inlined_call_operand.vmem [shape: bf16[16,64], index: 0, kind: input, shape index: {}]
  %s1 = inlined_call_operand.vmem [shape: bf16[64,128], index: 1, kind: input, shape index: {}]
  %s2 = inlined_call_operand.vmem [shape: f32[1,128], index: 2, kind: input, shape index: {}]
  %s3 = inlined_call_operand.vmem [shape: f32[16,128], index: 3, kind: output, shape index: {}]
  %s4 = sld [smem:[#allocation0]]
  $region22: #{bert_base_uncased_tweet_forward.5} parent=0
    _
  %s6 = ssub.s32 1, %s4
  %s7 = scalar_select 0, %s6, %s4
  // Predicated region
  $region2: #{bert_base_uncased_tweet_forward.5} parent=0 // pred_check
    _
  $region3: #{bert_base_uncased_tweet_forward.5} parent=0 // pred_check_branch
    %9 = sbr.rel (0) target = $region5
  $region4: #{bert_base_uncased_tweet_forward.5} parent=0 // pred_region
    _
  $region5: #{bert_base_uncased_tweet_forward.5} parent=0 // pred_fallthru
    _
  // Predicated region
  $region6: #{bert_base_uncased_tweet_forward.5} parent=0 // pred_check
    _
  $region7: #{bert_base_uncased_tweet_forward.5} parent=0 // pred_check_branch
    %11 = sbr.rel (0) target = $region9
  $region8: #{bert_base_uncased_tweet_forward.5} parent=0 // pred_region
    _
  $region9: #{bert_base_uncased_tweet_forward.5} parent=0 // pred_fallthru
    _
  // Predicated region
  $region10: #{bert_base_uncased_tweet_forward.5} parent=0 // pred_check
    _
  $region11: #{bert_base_uncased_tweet_forward.5} parent=0 // pred_check_branch
    %13 = sbr.rel (0) target = $region13
  $region12: #{bert_base_uncased_tweet_forward.5} parent=0 // pred_region
    _
  $region13: #{bert_base_uncased_tweet_forward.5} parent=0 // pred_fallthru
    _
  %v15 = vld [vmem:[%s0] sm:$0xf]
  %v16 = vld [vmem:[%s0 + $0x4] sm:$0xf]
  %v17 = vld [vmem:[%s1] sm:$0xf]
  %v18 = vld [vmem:[%s1 + $0x4] sm:$0xf]
  %v19 = vld [vmem:[%s1 + $0x8] sm:$0xf]
  %v20 = vld [vmem:[%s1 + $0xc] sm:$0xf]
  %v21 = vld [vmem:[%s1 + $0x10] sm:$0xf]
  %v22 = vld [vmem:[%s1 + $0x14] sm:$0xf]
  %v23 = vld [vmem:[%s1 + $0x18] sm:$0xf]
  %v24 = vld [vmem:[%s1 + $0x1c] sm:$0xf]
  %v25 = vld [vmem:[%s2] sm:$0x1]
  %v27 = vlaneseq
  %v28 = vshrl.u32 %v27, 7
  %v29 = vsub.s32 0, %v28
  %v30 = vrot.slane %v25, %v29
  %v34 = vunpack.c.l.b16 %v15
  %v35 = vunpack.c.l.b16 %v16
  %v36 = vpack.c.b16 %v35, %v34
  %v45 = vunpack.c.l.b16 %v17
  %v46 = vunpack.c.l.b16 %v18
  %v47 = vunpack.c.l.b16 %v19
  %v48 = vunpack.c.l.b16 %v20
  %v49 = vunpack.c.l.b16 %v21
  %v50 = vunpack.c.l.b16 %v22
  %v51 = vunpack.c.l.b16 %v23
  %v52 = vunpack.c.l.b16 %v24
  %v53 = vpack.c.b16 %v46, %v45
  %v54 = vpack.c.b16 %v48, %v47
  %v55 = vpack.c.b16 %v50, %v49
  %v56 = vpack.c.b16 %v52, %v51
  %vm61 = vcmask 523264
  %v63 = vsel %vm61, %v36, 0
  %65 = vmatprep.subr.bf16.mxu0 0
  %66 = vmatpush1.bf16.msra.mxu0 %v53
  %67 = vmatprep.subr.bf16.mxu0 0
  %68 = vmatpush1.bf16.msra.mxu0 %v54
  %69 = vmatprep.subr.bf16.mxu0 0
  %70 = vmatpush1.bf16.msra.mxu0 %v55
  %71 = vmatprep.subr.bf16.mxu0 0
  %72 = vmatpush1.bf16.msra.mxu0 %v56
  %73 = vmatprep.subr.bf16.mxu0 0
  %74 = vmatpush1.bf16.msra.mxu0 0
  %75 = vmatprep.subr.bf16.mxu0 0
  %76 = vmatpush1.bf16.msra.mxu0 0
  %77 = vmatprep.subr.bf16.mxu0 0
  %78 = vmatpush1.bf16.msra.mxu0 0
  %79 = vmatprep.subr.bf16.mxu0 0
  %80 = vmatpush1.bf16.msra.mxu0 0
  %81 = vmatprep.subr.bf16.mxu0 0
  %82 = vmatpush1.bf16.msra.mxu0 0
  %83 = vmatprep.subr.bf16.mxu0 0
  %84 = vmatpush1.bf16.msra.mxu0 0
  %85 = vmatprep.subr.bf16.mxu0 0
  %86 = vmatpush1.bf16.msra.mxu0 0
  %87 = vmatprep.subr.bf16.mxu0 0
  %88 = vmatpush1.bf16.msra.mxu0 0
  %89 = vmatprep.subr.bf16.mxu0 0
  %90 = vmatpush1.bf16.msra.mxu0 0
  %91 = vmatprep.subr.bf16.mxu0 0
  %92 = vmatpush1.bf16.msra.mxu0 0
  %93 = vmatprep.subr.bf16.mxu0 0
  %94 = vmatpush1.bf16.msra.mxu0 0
  %95 = vmatprep.subr.bf16.mxu0 0
  %96 = vmatpush1.bf16.msra.mxu0 0
  %97 = vmatprep.mubr.bf16.mxu0 0
  %98 = vmatmul.mubr.bf16.gmra.mrb[0].mxu0 %v63
  %v99 = vpop.f32.mrb[0].mxu0
  %v100 = vadd.f32 %v30, %v99
  %v101 = vpop.f32.mrb[0].mxu0
  %v102 = vpop.f32.mrb[0].mxu0
  %v103 = vadd.f32 %v30, %v102
  %v104 = vpop.f32.mrb[0].mxu0
  %105 = vdwg.mxu0
  %106 = vst [vmem:[%s3] sm:$0xff] %v100
  %107 = vst [vmem:[%s3 + $0x8] sm:$0xff] %v103
  // Predicated region
  $region14: #{bert_base_uncased_tweet_forward.5} parent=0 // pred_check
    _
  $region15: #{bert_base_uncased_tweet_forward.5} parent=0 // pred_check_branch
    %109 = sbr.rel (0) target = $region17
  $region16: #{bert_base_uncased_tweet_forward.5} parent=0 // pred_region
    _
  $region17: #{bert_base_uncased_tweet_forward.5} parent=0 // pred_fallthru
    _
  // Predicated region
  $region18: #{bert_base_uncased_tweet_forward.5} parent=0 // pred_check
    _
  $region19: #{bert_base_uncased_tweet_forward.5} parent=0 // pred_check_branch
    %111 = sbr.rel (0) target = $region21
  $region20: #{bert_base_uncased_tweet_forward.5} parent=0 // pred_region
    _
  $region21: #{bert_base_uncased_tweet_forward.5} parent=0 // pred_fallthru
    _

// kernel: bert_base_uncased_tweet_forward.4
$region0: #{bert_base_uncased_tweet_forward.4}
  #allocation0 [shape = 'u32[]', space=smem, size = 0x4, offset = 0x4, fixed_abs, tag = 'smem constant byte address 0x4 - core index']
  #allocation1 [shape = 'u32[144,128]{1,0:T(1,128)}', space=vmem, size = 0x12000, scoped, tag = 'internal scratch']
  #allocation2 [shape = 'f32[8,64]{1,0:T(8,128)}', space=vmem, size = 0x1000, scoped, tag = 'scratch operand']
  %s0 = inlined_call_operand.vmem [shape: bf16[2,8,64], index: 0, kind: input, shape index: {}]
  %s1 = inlined_call_operand.vmem [shape: f32[2,1,8], index: 1, kind: input, shape index: {}]
  %s2 = inlined_call_operand.vmem [shape: bf16[2,64,192], index: 2, kind: input, shape index: {}]
  %s3 = inlined_call_operand.vmem [shape: f32[2,1,192], index: 3, kind: input, shape index: {}]
  %s4 = inlined_call_operand.vmem [shape: bf16[2,64,64], index: 4, kind: input, shape index: {}]
  %s5 = inlined_call_operand.vmem [shape: f32[2,1,64], index: 5, kind: input, shape index: {}]
  %s6 = inlined_call_operand.vmem [shape: f32[2,1,64], index: 6, kind: input, shape index: {}]
  %s7 = inlined_call_operand.vmem [shape: f32[2,1,64], index: 7, kind: input, shape index: {}]
  %s8 = inlined_call_operand.vmem [shape: bf16[2,64,128], index: 8, kind: input, shape index: {}]
  %s9 = inlined_call_operand.vmem [shape: f32[2,1,128], index: 9, kind: input, shape index: {}]
  %s10 = inlined_call_operand.vmem [shape: bf16[2,128,64], index: 10, kind: input, shape index: {}]
  %s11 = inlined_call_operand.vmem [shape: f32[2,1,64], index: 11, kind: input, shape index: {}]
  %s12 = inlined_call_operand.vmem [shape: f32[2,1,64], index: 12, kind: input, shape index: {}]
  %s13 = inlined_call_operand.vmem [shape: f32[2,1,64], index: 13, kind: input, shape index: {}]
  %s14 = inlined_call_operand.vmem [shape: bf16[2,8,64], index: 14, kind: output, shape index: {}]
  %s15 = sld [smem:[#allocation0]]
  $region97: #{bert_base_uncased_tweet_forward.4} parent=0
    _
  %s17 = ssub.s32 1, %s15
  %s18 = scalar_select 0, %s17, %s15
  loop: start=0, step=1, limit=6
  $region2: #{bert_base_uncased_tweet_forward.4} parent=0 // loop_pre_header
    _
  $region3: #{bert_base_uncased_tweet_forward.4} parent=0 // loop_header
    %s20 = sphi 0, %s24
    %p21 = scmp.ge.s32.totalorder %s20, 6
    %s27 = sphi 0, %s39
    %s28 = sphi 0, %s35
    %s29 = sphi 0, %s27
    %s30 = sphi 0, %s28
    %s31 = sphi 0, %s29
    %s32 = sphi 0, %s30
    %s42 = sphi 0, %s44
    %s45 = sphi 0, %s42
    %s46 = sphi 0, %s45
    %s62 = sphi 0, %s46
    %s68 = sphi 0, %s70
    %s71 = sphi 0, %s68
    %s72 = sphi 0, %s71
    %s88 = sphi 0, %s72
    %s94 = sphi 0, %s96
    %s97 = sphi 0, %s94
    %s98 = sphi 0, %s97
    %s114 = sphi 0, %s98
    %s120 = sphi 0, %s122
    %s123 = sphi 0, %s120
    %s124 = sphi 0, %s123
    %s140 = sphi 0, %s124
    %s146 = sphi 0, %s148
    %s149 = sphi 0, %s146
    %s150 = sphi 0, %s149
    %s166 = sphi 0, %s150
    %s172 = sphi 0, %s174
    %s175 = sphi 0, %s172
    %s176 = sphi 0, %s175
    %s192 = sphi 0, %s176
    %s198 = sphi 0, %s200
    %s201 = sphi 0, %s198
    %s202 = sphi 0, %s201
    %s218 = sphi 0, %s202
    %s224 = sphi 0, %s226
    %s227 = sphi 0, %s224
    %s228 = sphi 0, %s227
    %s244 = sphi 0, %s228
    %s250 = sphi 0, %s252
    %s253 = sphi 0, %s250
    %s254 = sphi 0, %s253
    %s270 = sphi 0, %s254
    %s276 = sphi 0, %s278
    %s279 = sphi 0, %s276
    %s280 = sphi 0, %s279
    %s296 = sphi 0, %s280
    %s302 = sphi 0, %s304
    %s305 = sphi 0, %s302
    %s306 = sphi 0, %s305
    %s322 = sphi 0, %s306
    %s328 = sphi 0, %s330
    %s331 = sphi 0, %s328
    %s332 = sphi 0, %s331
    %s348 = sphi 0, %s332
    %s354 = sphi 0, %s356
    %s357 = sphi 0, %s354
    %s358 = sphi 0, %s357
    %s374 = sphi 0, %s358
    %s380 = sphi 0, %s382
    %s383 = sphi 0, %s380
    %s384 = sphi 0, %s383
    %s400 = sphi 0, %s384
    %s406 = sphi 0, %s408
    %s409 = sphi 0, %s406
    %s410 = sphi 0, %s409
    %s426 = sphi 0, %s410
  $region4: #{bert_base_uncased_tweet_forward.4} parent=0 // loop_header_branch
    %23 = sbr.rel (%p21) target = $region8
  $region5: #{bert_base_uncased_tweet_forward.4} parent=0 // loop_body
    %s25 = ssub.s32 %s20, 1
    %s26 = ssub.s32 %s20, 2
    %s33 = sadd.s32 1, %s28
    %p34 = scmp.ge.s32.totalorder %s33, 2
    %s35 = scalar_select %p34, 0, %s33
    %s36 = sadd.s32 1, %s27
    %s37 = scalar_select %p34, %s36, %s27
    %p38 = scmp.ge.s32.totalorder %s37, 2
    %s39 = scalar_select %p38, 0, %s37
    %s40 = ssub.s32 %s27, %s39
    %p41 = scmp.eq.s32.totalorder %s40, 0
    %s43 = sadd.s32 %s42, 1
    %s44 = scalar_select %p41, %s42, %s43
    %p47 = pneg %p41
    %p48 = scmp.eq.s32.totalorder %s20, 3
    %p49 = por %p47, %p48
    %p50 = scmp.ne.s32.totalorder %s42, %s45
    %p51 = scmp.eq.s32.totalorder %s20, 0
    %p52 = por %p50, %p51
    %p53 = scmp.ne.s32.totalorder %s42, %s45
    %p54 = scmp.eq.s32.totalorder %s25, 3
    %p55 = por %p53, %p54
    %p56 = scmp.ne.s32.totalorder %s45, %s46
    %p57 = scmp.eq.s32.totalorder %s25, 0
    %p58 = por %p56, %p57
    %p59 = scmp.ne.s32.totalorder %s45, %s46
    %p60 = scmp.eq.s32.totalorder %s26, 3
    %p61 = por %p59, %p60
    %p63 = scmp.ne.s32.totalorder %s46, %s62
    %p64 = scmp.eq.s32.totalorder %s26, 0
    %p65 = por %p63, %p64
    %s66 = ssub.s32 %s27, %s39
    %p67 = scmp.eq.s32.totalorder %s66, 0
    %s69 = sadd.s32 %s68, 1
    %s70 = scalar_select %p67, %s68, %s69
    %p73 = pneg %p67
    %p74 = scmp.eq.s32.totalorder %s20, 3
    %p75 = por %p73, %p74
    %p76 = scmp.ne.s32.totalorder %s68, %s71
    %p77 = scmp.eq.s32.totalorder %s20, 0
    %p78 = por %p76, %p77
    %p79 = scmp.ne.s32.totalorder %s68, %s71
    %p80 = scmp.eq.s32.totalorder %s25, 3
    %p81 = por %p79, %p80
    %p82 = scmp.ne.s32.totalorder %s71, %s72
    %p83 = scmp.eq.s32.totalorder %s25, 0
    %p84 = por %p82, %p83
    %p85 = scmp.ne.s32.totalorder %s71, %s72
    %p86 = scmp.eq.s32.totalorder %s26, 3
    %p87 = por %p85, %p86
    %p89 = scmp.ne.s32.totalorder %s72, %s88
    %p90 = scmp.eq.s32.totalorder %s26, 0
    %p91 = por %p89, %p90
    %s92 = ssub.s32 %s28, %s35
    %p93 = scmp.eq.s32.totalorder %s92, 0
    %s95 = sadd.s32 %s94, 1
    %s96 = scalar_select %p93, %s94, %s95
    %p99 = pneg %p93
    %p100 = scmp.eq.s32.totalorder %s20, 3
    %p101 = por %p99, %p100
    %p102 = scmp.ne.s32.totalorder %s94, %s97
    %p103 = scmp.eq.s32.totalorder %s20, 0
    %p104 = por %p102, %p103
    %p105 = scmp.ne.s32.totalorder %s94, %s97
    %p106 = scmp.eq.s32.totalorder %s25, 3
    %p107 = por %p105, %p106
    %p108 = scmp.ne.s32.totalorder %s97, %s98
    %p109 = scmp.eq.s32.totalorder %s25, 0
    %p110 = por %p108, %p109
    %p111 = scmp.ne.s32.totalorder %s97, %s98
    %p112 = scmp.eq.s32.totalorder %s26, 3
    %p113 = por %p111, %p112
    %p115 = scmp.ne.s32.totalorder %s98, %s114
    %p116 = scmp.eq.s32.totalorder %s26, 0
    %p117 = por %p115, %p116
    %s118 = ssub.s32 %s28, %s35
    %p119 = scmp.eq.s32.totalorder %s118, 0
    %s121 = sadd.s32 %s120, 1
    %s122 = scalar_select %p119, %s120, %s121
    %p125 = pneg %p119
    %p126 = scmp.eq.s32.totalorder %s20, 3
    %p127 = por %p125, %p126
    %p128 = scmp.ne.s32.totalorder %s120, %s123
    %p129 = scmp.eq.s32.totalorder %s20, 0
    %p130 = por %p128, %p129
    %p131 = scmp.ne.s32.totalorder %s120, %s123
    %p132 = scmp.eq.s32.totalorder %s25, 3
    %p133 = por %p131, %p132
    %p134 = scmp.ne.s32.totalorder %s123, %s124
    %p135 = scmp.eq.s32.totalorder %s25, 0
    %p136 = por %p134, %p135
    %p137 = scmp.ne.s32.totalorder %s123, %s124
    %p138 = scmp.eq.s32.totalorder %s26, 3
    %p139 = por %p137, %p138
    %p141 = scmp.ne.s32.totalorder %s124, %s140
    %p142 = scmp.eq.s32.totalorder %s26, 0
    %p143 = por %p141, %p142
    %s144 = ssub.s32 %s28, %s35
    %p145 = scmp.eq.s32.totalorder %s144, 0
    %s147 = sadd.s32 %s146, 1
    %s148 = scalar_select %p145, %s146, %s147
    %p151 = pneg %p145
    %p152 = scmp.eq.s32.totalorder %s20, 3
    %p153 = por %p151, %p152
    %p154 = scmp.ne.s32.totalorder %s146, %s149
    %p155 = scmp.eq.s32.totalorder %s20, 0
    %p156 = por %p154, %p155
    %p157 = scmp.ne.s32.totalorder %s146, %s149
    %p158 = scmp.eq.s32.totalorder %s25, 3
    %p159 = por %p157, %p158
    %p160 = scmp.ne.s32.totalorder %s149, %s150
    %p161 = scmp.eq.s32.totalorder %s25, 0
    %p162 = por %p160, %p161
    %p163 = scmp.ne.s32.totalorder %s149, %s150
    %p164 = scmp.eq.s32.totalorder %s26, 3
    %p165 = por %p163, %p164
    %p167 = scmp.ne.s32.totalorder %s150, %s166
    %p168 = scmp.eq.s32.totalorder %s26, 0
    %p169 = por %p167, %p168
    %s170 = ssub.s32 %s28, %s35
    %p171 = scmp.eq.s32.totalorder %s170, 0
    %s173 = sadd.s32 %s172, 1
    %s174 = scalar_select %p171, %s172, %s173
    %p177 = pneg %p171
    %p178 = scmp.eq.s32.totalorder %s20, 3
    %p179 = por %p177, %p178
    %p180 = scmp.ne.s32.totalorder %s172, %s175
    %p181 = scmp.eq.s32.totalorder %s20, 0
    %p182 = por %p180, %p181
    %p183 = scmp.ne.s32.totalorder %s172, %s175
    %p184 = scmp.eq.s32.totalorder %s25, 3
    %p185 = por %p183, %p184
    %p186 = scmp.ne.s32.totalorder %s175, %s176
    %p187 = scmp.eq.s32.totalorder %s25, 0
    %p188 = por %p186, %p187
    %p189 = scmp.ne.s32.totalorder %s175, %s176
    %p190 = scmp.eq.s32.totalorder %s26, 3
    %p191 = por %p189, %p190
    %p193 = scmp.ne.s32.totalorder %s176, %s192
    %p194 = scmp.eq.s32.totalorder %s26, 0
    %p195 = por %p193, %p194
    %s196 = ssub.s32 %s28, %s35
    %p197 = scmp.eq.s32.totalorder %s196, 0
    %s199 = sadd.s32 %s198, 1
    %s200 = scalar_select %p197, %s198, %s199
    %p203 = pneg %p197
    %p204 = scmp.eq.s32.totalorder %s20, 3
    %p205 = por %p203, %p204
    %p206 = scmp.ne.s32.totalorder %s198, %s201
    %p207 = scmp.eq.s32.totalorder %s20, 0
    %p208 = por %p206, %p207
    %p209 = scmp.ne.s32.totalorder %s198, %s201
    %p210 = scmp.eq.s32.totalorder %s25, 3
    %p211 = por %p209, %p210
    %p212 = scmp.ne.s32.totalorder %s201, %s202
    %p213 = scmp.eq.s32.totalorder %s25, 0
    %p214 = por %p212, %p213
    %p215 = scmp.ne.s32.totalorder %s201, %s202
    %p216 = scmp.eq.s32.totalorder %s26, 3
    %p217 = por %p215, %p216
    %p219 = scmp.ne.s32.totalorder %s202, %s218
    %p220 = scmp.eq.s32.totalorder %s26, 0
    %p221 = por %p219, %p220
    %s222 = ssub.s32 %s28, %s35
    %p223 = scmp.eq.s32.totalorder %s222, 0
    %s225 = sadd.s32 %s224, 1
    %s226 = scalar_select %p223, %s224, %s225
    %p229 = pneg %p223
    %p230 = scmp.eq.s32.totalorder %s20, 3
    %p231 = por %p229, %p230
    %p232 = scmp.ne.s32.totalorder %s224, %s227
    %p233 = scmp.eq.s32.totalorder %s20, 0
    %p234 = por %p232, %p233
    %p235 = scmp.ne.s32.totalorder %s224, %s227
    %p236 = scmp.eq.s32.totalorder %s25, 3
    %p237 = por %p235, %p236
    %p238 = scmp.ne.s32.totalorder %s227, %s228
    %p239 = scmp.eq.s32.totalorder %s25, 0
    %p240 = por %p238, %p239
    %p241 = scmp.ne.s32.totalorder %s227, %s228
    %p242 = scmp.eq.s32.totalorder %s26, 3
    %p243 = por %p241, %p242
    %p245 = scmp.ne.s32.totalorder %s228, %s244
    %p246 = scmp.eq.s32.totalorder %s26, 0
    %p247 = por %p245, %p246
    %s248 = ssub.s32 %s28, %s35
    %p249 = scmp.eq.s32.totalorder %s248, 0
    %s251 = sadd.s32 %s250, 1
    %s252 = scalar_select %p249, %s250, %s251
    %p255 = pneg %p249
    %p256 = scmp.eq.s32.totalorder %s20, 3
    %p257 = por %p255, %p256
    %p258 = scmp.ne.s32.totalorder %s250, %s253
    %p259 = scmp.eq.s32.totalorder %s20, 0
    %p260 = por %p258, %p259
    %p261 = scmp.ne.s32.totalorder %s250, %s253
    %p262 = scmp.eq.s32.totalorder %s25, 3
    %p263 = por %p261, %p262
    %p264 = scmp.ne.s32.totalorder %s253, %s254
    %p265 = scmp.eq.s32.totalorder %s25, 0
    %p266 = por %p264, %p265
    %p267 = scmp.ne.s32.totalorder %s253, %s254
    %p268 = scmp.eq.s32.totalorder %s26, 3
    %p269 = por %p267, %p268
    %p271 = scmp.ne.s32.totalorder %s254, %s270
    %p272 = scmp.eq.s32.totalorder %s26, 0
    %p273 = por %p271, %p272
    %s274 = ssub.s32 %s28, %s35
    %p275 = scmp.eq.s32.totalorder %s274, 0
    %s277 = sadd.s32 %s276, 1
    %s278 = scalar_select %p275, %s276, %s277
    %p281 = pneg %p275
    %p282 = scmp.eq.s32.totalorder %s20, 3
    %p283 = por %p281, %p282
    %p284 = scmp.ne.s32.totalorder %s276, %s279
    %p285 = scmp.eq.s32.totalorder %s20, 0
    %p286 = por %p284, %p285
    %p287 = scmp.ne.s32.totalorder %s276, %s279
    %p288 = scmp.eq.s32.totalorder %s25, 3
    %p289 = por %p287, %p288
    %p290 = scmp.ne.s32.totalorder %s279, %s280
    %p291 = scmp.eq.s32.totalorder %s25, 0
    %p292 = por %p290, %p291
    %p293 = scmp.ne.s32.totalorder %s279, %s280
    %p294 = scmp.eq.s32.totalorder %s26, 3
    %p295 = por %p293, %p294
    %p297 = scmp.ne.s32.totalorder %s280, %s296
    %p298 = scmp.eq.s32.totalorder %s26, 0
    %p299 = por %p297, %p298
    %s300 = ssub.s32 %s28, %s35
    %p301 = scmp.eq.s32.totalorder %s300, 0
    %s303 = sadd.s32 %s302, 1
    %s304 = scalar_select %p301, %s302, %s303
    %p307 = pneg %p301
    %p308 = scmp.eq.s32.totalorder %s20, 3
    %p309 = por %p307, %p308
    %p310 = scmp.ne.s32.totalorder %s302, %s305
    %p311 = scmp.eq.s32.totalorder %s20, 0
    %p312 = por %p310, %p311
    %p313 = scmp.ne.s32.totalorder %s302, %s305
    %p314 = scmp.eq.s32.totalorder %s25, 3
    %p315 = por %p313, %p314
    %p316 = scmp.ne.s32.totalorder %s305, %s306
    %p317 = scmp.eq.s32.totalorder %s25, 0
    %p318 = por %p316, %p317
    %p319 = scmp.ne.s32.totalorder %s305, %s306
    %p320 = scmp.eq.s32.totalorder %s26, 3
    %p321 = por %p319, %p320
    %p323 = scmp.ne.s32.totalorder %s306, %s322
    %p324 = scmp.eq.s32.totalorder %s26, 0
    %p325 = por %p323, %p324
    %s326 = ssub.s32 %s28, %s35
    %p327 = scmp.eq.s32.totalorder %s326, 0
    %s329 = sadd.s32 %s328, 1
    %s330 = scalar_select %p327, %s328, %s329
    %p333 = pneg %p327
    %p334 = scmp.eq.s32.totalorder %s20, 3
    %p335 = por %p333, %p334
    %p336 = scmp.ne.s32.totalorder %s328, %s331
    %p337 = scmp.eq.s32.totalorder %s20, 0
    %p338 = por %p336, %p337
    %p339 = scmp.ne.s32.totalorder %s328, %s331
    %p340 = scmp.eq.s32.totalorder %s25, 3
    %p341 = por %p339, %p340
    %p342 = scmp.ne.s32.totalorder %s331, %s332
    %p343 = scmp.eq.s32.totalorder %s25, 0
    %p344 = por %p342, %p343
    %p345 = scmp.ne.s32.totalorder %s331, %s332
    %p346 = scmp.eq.s32.totalorder %s26, 3
    %p347 = por %p345, %p346
    %p349 = scmp.ne.s32.totalorder %s332, %s348
    %p350 = scmp.eq.s32.totalorder %s26, 0
    %p351 = por %p349, %p350
    %s352 = ssub.s32 %s28, %s35
    %p353 = scmp.eq.s32.totalorder %s352, 0
    %s355 = sadd.s32 %s354, 1
    %s356 = scalar_select %p353, %s354, %s355
    %p359 = pneg %p353
    %p360 = scmp.eq.s32.totalorder %s20, 3
    %p361 = por %p359, %p360
    %p362 = scmp.ne.s32.totalorder %s354, %s357
    %p363 = scmp.eq.s32.totalorder %s20, 0
    %p364 = por %p362, %p363
    %p365 = scmp.ne.s32.totalorder %s354, %s357
    %p366 = scmp.eq.s32.totalorder %s25, 3
    %p367 = por %p365, %p366
    %p368 = scmp.ne.s32.totalorder %s357, %s358
    %p369 = scmp.eq.s32.totalorder %s25, 0
    %p370 = por %p368, %p369
    %p371 = scmp.ne.s32.totalorder %s357, %s358
    %p372 = scmp.eq.s32.totalorder %s26, 3
    %p373 = por %p371, %p372
    %p375 = scmp.ne.s32.totalorder %s358, %s374
    %p376 = scmp.eq.s32.totalorder %s26, 0
    %p377 = por %p375, %p376
    %s378 = ssub.s32 %s28, %s35
    %p379 = scmp.eq.s32.totalorder %s378, 0
    %s381 = sadd.s32 %s380, 1
    %s382 = scalar_select %p379, %s380, %s381
    %p385 = pneg %p379
    %p386 = scmp.eq.s32.totalorder %s20, 3
    %p387 = por %p385, %p386
    %p388 = scmp.ne.s32.totalorder %s380, %s383
    %p389 = scmp.eq.s32.totalorder %s20, 0
    %p390 = por %p388, %p389
    %p391 = scmp.ne.s32.totalorder %s380, %s383
    %p392 = scmp.eq.s32.totalorder %s25, 3
    %p393 = por %p391, %p392
    %p394 = scmp.ne.s32.totalorder %s383, %s384
    %p395 = scmp.eq.s32.totalorder %s25, 0
    %p396 = por %p394, %p395
    %p397 = scmp.ne.s32.totalorder %s383, %s384
    %p398 = scmp.eq.s32.totalorder %s26, 3
    %p399 = por %p397, %p398
    %p401 = scmp.ne.s32.totalorder %s384, %s400
    %p402 = scmp.eq.s32.totalorder %s26, 0
    %p403 = por %p401, %p402
    %s404 = ssub.s32 %s27, %s39
    %p405 = scmp.eq.s32.totalorder %s404, 0
    %s407 = sadd.s32 %s406, 1
    %s408 = scalar_select %p405, %s406, %s407
    %p411 = pneg %p405
    %p412 = scmp.eq.s32.totalorder %s20, 3
    %p413 = por %p411, %p412
    %p414 = scmp.ne.s32.totalorder %s406, %s409
    %p415 = scmp.eq.s32.totalorder %s20, 0
    %p416 = por %p414, %p415
    %p417 = scmp.ne.s32.totalorder %s406, %s409
    %p418 = scmp.eq.s32.totalorder %s25, 3
    %p419 = por %p417, %p418
    %p420 = scmp.ne.s32.totalorder %s409, %s410
    %p421 = scmp.eq.s32.totalorder %s25, 0
    %p422 = por %p420, %p421
    %p423 = scmp.ne.s32.totalorder %s409, %s410
    %p424 = scmp.eq.s32.totalorder %s26, 3
    %p425 = por %p423, %p424
    %p427 = scmp.ne.s32.totalorder %s410, %s426
    %p428 = scmp.eq.s32.totalorder %s26, 0
    %p429 = por %p427, %p428
    %p430 = scmp.le.s32.totalorder 1, %s20
    %p431 = scmp.lt.s32.totalorder %s20, 5
    %p432 = pnand %p430, %p431
    %p433 = pneg %p432
    // Predicated region
    $region9: #{bert_base_uncased_tweet_forward.4} parent=5 // pred_check
      _
    $region10: #{bert_base_uncased_tweet_forward.4} parent=5 // pred_check_branch
      %435 = sbr.rel (%p432) target = $region12
    $region11: #{bert_base_uncased_tweet_forward.4} parent=5 // pred_region
      %s436 = ssub.s32 %s20, 1
    $region12: #{bert_base_uncased_tweet_forward.4} parent=5 // pred_fallthru
      _
    %p437 = scmp.lt.s32.totalorder %s20, 4
    // Predicated region
    $region13: #{bert_base_uncased_tweet_forward.4} parent=5 // pred_check
      %p438 = pneg %p437
    $region14: #{bert_base_uncased_tweet_forward.4} parent=5 // pred_check_branch
      %440 = sbr.rel (%p438) target = $region16
    $region15: #{bert_base_uncased_tweet_forward.4} parent=5 // pred_region
      // Predicated region
      $region17: #{bert_base_uncased_tweet_forward.4} parent=15 // pred_check
        %p441 = pneg %p52
      $region18: #{bert_base_uncased_tweet_forward.4} parent=15 // pred_check_branch
        %443 = sbr.rel (%p441) target = $region20
      $region19: #{bert_base_uncased_tweet_forward.4} parent=15 // pred_region
        %p444 = scmp.lt.s32.totalorder %s27, 1
        %s445 = scalar_select %p444, %s27, 1
        %s446 = smul.addr %s445, 4
        %s447 = scalar_lea.vmem %s0, %s446
      $region20: #{bert_base_uncased_tweet_forward.4} parent=15 // pred_fallthru
        _
      // Predicated region
      $region21: #{bert_base_uncased_tweet_forward.4} parent=15 // pred_check
        %p448 = pneg %p78
      $region22: #{bert_base_uncased_tweet_forward.4} parent=15 // pred_check_branch
        %450 = sbr.rel (%p448) target = $region24
      $region23: #{bert_base_uncased_tweet_forward.4} parent=15 // pred_region
        %p451 = scmp.lt.s32.totalorder %s27, 1
        %s452 = scalar_select %p451, %s27, 1
        %s453 = scalar_lea.vmem %s1, %s452
      $region24: #{bert_base_uncased_tweet_forward.4} parent=15 // pred_fallthru
        _
      // Predicated region
      $region25: #{bert_base_uncased_tweet_forward.4} parent=15 // pred_check
        %p454 = pneg %p104
      $region26: #{bert_base_uncased_tweet_forward.4} parent=15 // pred_check_branch
        %456 = sbr.rel (%p454) target = $region28
      $region27: #{bert_base_uncased_tweet_forward.4} parent=15 // pred_region
        %p457 = scmp.lt.s32.totalorder %s28, 1
        %s458 = scalar_select %p457, %s28, 1
        %s459 = smul.addr %s458, 16
        %s460 = smul.addr %s459, 4
        %s461 = scalar_lea.vmem %s2, %s460
      $region28: #{bert_base_uncased_tweet_forward.4} parent=15 // pred_fallthru
        _
      // Predicated region
      $region29: #{bert_base_uncased_tweet_forward.4} parent=15 // pred_check
        %p462 = pneg %p130
      $region30: #{bert_base_uncased_tweet_forward.4} parent=15 // pred_check_branch
        %464 = sbr.rel (%p462) target = $region32
      $region31: #{bert_base_uncased_tweet_forward.4} parent=15 // pred_region
        %p465 = scmp.lt.s32.totalorder %s28, 1
        %s466 = scalar_select %p465, %s28, 1
        %s467 = smul.addr %s466, 2
        %s468 = scalar_lea.vmem %s3, %s467
      $region32: #{bert_base_uncased_tweet_forward.4} parent=15 // pred_fallthru
        _
      // Predicated region
      $region33: #{bert_base_uncased_tweet_forward.4} parent=15 // pred_check
        %p469 = pneg %p156
      $region34: #{bert_base_uncased_tweet_forward.4} parent=15 // pred_check_branch
        %471 = sbr.rel (%p469) target = $region36
      $region35: #{bert_base_uncased_tweet_forward.4} parent=15 // pred_region
        %p472 = scmp.lt.s32.totalorder %s28, 1
        %s473 = scalar_select %p472, %s28, 1
        %s474 = smul.addr %s473, 8
        %s475 = smul.addr %s474, 4
        %s476 = scalar_lea.vmem %s4, %s475
      $region36: #{bert_base_uncased_tweet_forward.4} parent=15 // pred_fallthru
        _
      // Predicated region
      $region37: #{bert_base_uncased_tweet_forward.4} parent=15 // pred_check
        %p477 = pneg %p182
      $region38: #{bert_base_uncased_tweet_forward.4} parent=15 // pred_check_branch
        %479 = sbr.rel (%p477) target = $region40
      $region39: #{bert_base_uncased_tweet_forward.4} parent=15 // pred_region
        %p480 = scmp.lt.s32.totalorder %s28, 1
        %s481 = scalar_select %p480, %s28, 1
        %s482 = scalar_lea.vmem %s5, %s481
      $region40: #{bert_base_uncased_tweet_forward.4} parent=15 // pred_fallthru
        _
      // Predicated region
      $region41: #{bert_base_uncased_tweet_forward.4} parent=15 // pred_check
        %p483 = pneg %p208
      $region42: #{bert_base_uncased_tweet_forward.4} parent=15 // pred_check_branch
        %485 = sbr.rel (%p483) target = $region44
      $region43: #{bert_base_uncased_tweet_forward.4} parent=15 // pred_region
        %p486 = scmp.lt.s32.totalorder %s28, 1
        %s487 = scalar_select %p486, %s28, 1
        %s488 = scalar_lea.vmem %s6, %s487
      $region44: #{bert_base_uncased_tweet_forward.4} parent=15 // pred_fallthru
        _
      // Predicated region
      $region45: #{bert_base_uncased_tweet_forward.4} parent=15 // pred_check
        %p489 = pneg %p234
      $region46: #{bert_base_uncased_tweet_forward.4} parent=15 // pred_check_branch
        %491 = sbr.rel (%p489) target = $region48
      $region47: #{bert_base_uncased_tweet_forward.4} parent=15 // pred_region
        %p492 = scmp.lt.s32.totalorder %s28, 1
        %s493 = scalar_select %p492, %s28, 1
        %s494 = scalar_lea.vmem %s7, %s493
      $region48: #{bert_base_uncased_tweet_forward.4} parent=15 // pred_fallthru
        _
      // Predicated region
      $region49: #{bert_base_uncased_tweet_forward.4} parent=15 // pred_check
        %p495 = pneg %p260
      $region50: #{bert_base_uncased_tweet_forward.4} parent=15 // pred_check_branch
        %497 = sbr.rel (%p495) target = $region52
      $region51: #{bert_base_uncased_tweet_forward.4} parent=15 // pred_region
        %p498 = scmp.lt.s32.totalorder %s28, 1
        %s499 = scalar_select %p498, %s28, 1
        %s500 = smul.addr %s499, 8
        %s501 = smul.addr %s500, 4
        %s502 = scalar_lea.vmem %s8, %s501
      $region52: #{bert_base_uncased_tweet_forward.4} parent=15 // pred_fallthru
        _
      // Predicated region
      $region53: #{bert_base_uncased_tweet_forward.4} parent=15 // pred_check
        %p503 = pneg %p286
      $region54: #{bert_base_uncased_tweet_forward.4} parent=15 // pred_check_branch
        %505 = sbr.rel (%p503) target = $region56
      $region55: #{bert_base_uncased_tweet_forward.4} parent=15 // pred_region
        %p506 = scmp.lt.s32.totalorder %s28, 1
        %s507 = scalar_select %p506, %s28, 1
        %s508 = scalar_lea.vmem %s9, %s507
      $region56: #{bert_base_uncased_tweet_forward.4} parent=15 // pred_fallthru
        _
      // Predicated region
      $region57: #{bert_base_uncased_tweet_forward.4} parent=15 // pred_check
        %p509 = pneg %p312
      $region58: #{bert_base_uncased_tweet_forward.4} parent=15 // pred_check_branch
        %511 = sbr.rel (%p509) target = $region60
      $region59: #{bert_base_uncased_tweet_forward.4} parent=15 // pred_region
        %p512 = scmp.lt.s32.totalorder %s28, 1
        %s513 = scalar_select %p512, %s28, 1
        %s514 = smul.addr %s513, 16
        %s515 = smul.addr %s514, 4
        %s516 = scalar_lea.vmem %s10, %s515
      $region60: #{bert_base_uncased_tweet_forward.4} parent=15 // pred_fallthru
        _
      // Predicated region
      $region61: #{bert_base_uncased_tweet_forward.4} parent=15 // pred_check
        %p517 = pneg %p338
      $region62: #{bert_base_uncased_tweet_forward.4} parent=15 // pred_check_branch
        %519 = sbr.rel (%p517) target = $region64
      $region63: #{bert_base_uncased_tweet_forward.4} parent=15 // pred_region
        %p520 = scmp.lt.s32.totalorder %s28, 1
        %s521 = scalar_select %p520, %s28, 1
        %s522 = scalar_lea.vmem %s11, %s521
      $region64: #{bert_base_uncased_tweet_forward.4} parent=15 // pred_fallthru
        _
      // Predicated region
      $region65: #{bert_base_uncased_tweet_forward.4} parent=15 // pred_check
        %p523 = pneg %p364
      $region66: #{bert_base_uncased_tweet_forward.4} parent=15 // pred_check_branch
        %525 = sbr.rel (%p523) target = $region68
      $region67: #{bert_base_uncased_tweet_forward.4} parent=15 // pred_region
        %p526 = scmp.lt.s32.totalorder %s28, 1
        %s527 = scalar_select %p526, %s28, 1
        %s528 = scalar_lea.vmem %s12, %s527
      $region68: #{bert_base_uncased_tweet_forward.4} parent=15 // pred_fallthru
        _
      // Predicated region
      $region69: #{bert_base_uncased_tweet_forward.4} parent=15 // pred_check
        %p529 = pneg %p390
      $region70: #{bert_base_uncased_tweet_forward.4} parent=15 // pred_check_branch
        %531 = sbr.rel (%p529) target = $region72
      $region71: #{bert_base_uncased_tweet_forward.4} parent=15 // pred_region
        %p532 = scmp.lt.s32.totalorder %s28, 1
        %s533 = scalar_select %p532, %s28, 1
        %s534 = scalar_lea.vmem %s13, %s533
      $region72: #{bert_base_uncased_tweet_forward.4} parent=15 // pred_fallthru
        _
    $region16: #{bert_base_uncased_tweet_forward.4} parent=5 // pred_fallthru
      _
    %p535 = scmp.le.s32.totalorder 1, %s20
    %p536 = scmp.lt.s32.totalorder %s20, 5
    %p537 = pnand %p535, %p536
    %p538 = pneg %p537
    // Predicated region
    $region73: #{bert_base_uncased_tweet_forward.4} parent=5 // pred_check
      _
    $region74: #{bert_base_uncased_tweet_forward.4} parent=5 // pred_check_branch
      %540 = sbr.rel (%p537) target = $region76
    $region75: #{bert_base_uncased_tweet_forward.4} parent=5 // pred_region
      %s541 = ssub.s32 %s20, 1
      %p542 = scmp.lt.s32.totalorder %s29, 1
      %s543 = scalar_select %p542, %s29, 1
      %s544 = smul.addr %s543, 4
      %s545 = scalar_lea.vmem %s0, %s544
      %p546 = pneg %p58
      %p547 = pneg %p55
      %p548 = scmp.lt.s32.totalorder %s29, 1
      %s549 = scalar_select %p548, %s29, 1
      %s550 = scalar_lea.vmem %s1, %s549
      %p551 = pneg %p84
      %p552 = pneg %p81
      %p553 = scmp.lt.s32.totalorder %s30, 1
      %s554 = scalar_select %p553, %s30, 1
      %s555 = smul.addr %s554, 16
      %s556 = smul.addr %s555, 4
      %s557 = scalar_lea.vmem %s2, %s556
      %p558 = pneg %p110
      %p559 = pneg %p107
      %p560 = scmp.lt.s32.totalorder %s30, 1
      %s561 = scalar_select %p560, %s30, 1
      %s562 = smul.addr %s561, 2
      %s563 = scalar_lea.vmem %s3, %s562
      %p564 = pneg %p136
      %p565 = pneg %p133
      %p566 = scmp.lt.s32.totalorder %s30, 1
      %s567 = scalar_select %p566, %s30, 1
      %s568 = smul.addr %s567, 8
      %s569 = smul.addr %s568, 4
      %s570 = scalar_lea.vmem %s4, %s569
      %p571 = pneg %p162
      %p572 = pneg %p159
      %p573 = scmp.lt.s32.totalorder %s30, 1
      %s574 = scalar_select %p573, %s30, 1
      %s575 = scalar_lea.vmem %s5, %s574
      %p576 = pneg %p188
      %p577 = pneg %p185
      %p578 = scmp.lt.s32.totalorder %s30, 1
      %s579 = scalar_select %p578, %s30, 1
      %s580 = scalar_lea.vmem %s6, %s579
      %p581 = pneg %p214
      %p582 = pneg %p211
      %p583 = scmp.lt.s32.totalorder %s30, 1
      %s584 = scalar_select %p583, %s30, 1
      %s585 = scalar_lea.vmem %s7, %s584
      %p586 = pneg %p240
      %p587 = pneg %p237
      %p588 = scmp.lt.s32.totalorder %s30, 1
      %s589 = scalar_select %p588, %s30, 1
      %s590 = smul.addr %s589, 8
      %s591 = smul.addr %s590, 4
      %s592 = scalar_lea.vmem %s8, %s591
      %p593 = pneg %p266
      %p594 = pneg %p263
      %p595 = scmp.lt.s32.totalorder %s30, 1
      %s596 = scalar_select %p595, %s30, 1
      %s597 = scalar_lea.vmem %s9, %s596
      %p598 = pneg %p292
      %p599 = pneg %p289
      %p600 = scmp.lt.s32.totalorder %s30, 1
      %s601 = scalar_select %p600, %s30, 1
      %s602 = smul.addr %s601, 16
      %s603 = smul.addr %s602, 4
      %s604 = scalar_lea.vmem %s10, %s603
      %p605 = pneg %p318
      %p606 = pneg %p315
      %p607 = scmp.lt.s32.totalorder %s30, 1
      %s608 = scalar_select %p607, %s30, 1
      %s609 = scalar_lea.vmem %s11, %s608
      %p610 = pneg %p344
      %p611 = pneg %p341
      %p612 = scmp.lt.s32.totalorder %s30, 1
      %s613 = scalar_select %p612, %s30, 1
      %s614 = scalar_lea.vmem %s12, %s613
      %p615 = pneg %p370
      %p616 = pneg %p367
      %p617 = scmp.lt.s32.totalorder %s30, 1
      %s618 = scalar_select %p617, %s30, 1
      %s619 = scalar_lea.vmem %s13, %s618
      %p620 = pneg %p396
      %p621 = pneg %p393
      %p622 = pneg %p422
      %p623 = pneg %p419
      %p624 = scmp.lt.s32.totalorder %s29, 1
      %s625 = scalar_select %p624, %s29, 1
      %s626 = smul.addr %s625, 4
      %s627 = scalar_lea.vmem %s14, %s626
      %p628 = scmp.lt.s32.totalorder %s29, 1
      %s629 = scalar_select %p628, %s29, 1
      %s630 = smul.addr %s629, 4
      %s631 = scalar_lea.vmem %s0, %s630
      %p632 = scmp.lt.s32.totalorder %s29, 1
      %s633 = scalar_select %p632, %s29, 1
      %s634 = scalar_lea.vmem %s1, %s633
      %p635 = scmp.lt.s32.totalorder %s30, 1
      %s636 = scalar_select %p635, %s30, 1
      %s637 = smul.addr %s636, 16
      %s638 = smul.addr %s637, 4
      %s639 = scalar_lea.vmem %s2, %s638
      %p640 = scmp.lt.s32.totalorder %s30, 1
      %s641 = scalar_select %p640, %s30, 1
      %s642 = smul.addr %s641, 2
      %s643 = scalar_lea.vmem %s3, %s642
      %p644 = scmp.lt.s32.totalorder %s30, 1
      %s645 = scalar_select %p644, %s30, 1
      %s646 = smul.addr %s645, 8
      %s647 = smul.addr %s646, 4
      %s648 = scalar_lea.vmem %s4, %s647
      %p649 = scmp.lt.s32.totalorder %s30, 1
      %s650 = scalar_select %p649, %s30, 1
      %s651 = scalar_lea.vmem %s5, %s650
      %p652 = scmp.lt.s32.totalorder %s30, 1
      %s653 = scalar_select %p652, %s30, 1
      %s654 = scalar_lea.vmem %s6, %s653
      %p655 = scmp.lt.s32.totalorder %s30, 1
      %s656 = scalar_select %p655, %s30, 1
      %s657 = scalar_lea.vmem %s7, %s656
      %p658 = scmp.lt.s32.totalorder %s30, 1
      %s659 = scalar_select %p658, %s30, 1
      %s660 = smul.addr %s659, 8
      %s661 = smul.addr %s660, 4
      %s662 = scalar_lea.vmem %s8, %s661
      %p663 = scmp.lt.s32.totalorder %s30, 1
      %s664 = scalar_select %p663, %s30, 1
      %s665 = scalar_lea.vmem %s9, %s664
      %p666 = scmp.lt.s32.totalorder %s30, 1
      %s667 = scalar_select %p666, %s30, 1
      %s668 = smul.addr %s667, 16
      %s669 = smul.addr %s668, 4
      %s670 = scalar_lea.vmem %s10, %s669
      %p671 = scmp.lt.s32.totalorder %s30, 1
      %s672 = scalar_select %p671, %s30, 1
      %s673 = scalar_lea.vmem %s11, %s672
      %p674 = scmp.lt.s32.totalorder %s30, 1
      %s675 = scalar_select %p674, %s30, 1
      %s676 = scalar_lea.vmem %s12, %s675
      %p677 = scmp.lt.s32.totalorder %s30, 1
      %s678 = scalar_select %p677, %s30, 1
      %s679 = scalar_lea.vmem %s13, %s678
      %p680 = scmp.lt.s32.totalorder %s29, 1
      %s681 = scalar_select %p680, %s29, 1
      %s682 = smul.addr %s681, 4
      %s683 = scalar_lea.vmem %s14, %s682
      %p685 = scmp.eq.s32.totalorder %s30, 0
      // Predicated region
      $region77: #{bert_base_uncased_tweet_forward.4} parent=75 // pred_check
        %p686 = pneg %p685
      $region78: #{bert_base_uncased_tweet_forward.4} parent=75 // pred_check_branch
        %688 = sbr.rel (%p686) target = $region80
      $region79: #{bert_base_uncased_tweet_forward.4} parent=75 // pred_region
        %v689 = vld [vmem:[%s631] sm:$0xf]
        %v690 = vunpack.c.l.bf16 %v689
        %vm691 = vcmask 523264
        %692 = vst.msk [vmem:[#allocation2] sm:$0xff] %vm691, %v690
      $region80: #{bert_base_uncased_tweet_forward.4} parent=75 // pred_fallthru
        _
      %v693 = vld [vmem:[#allocation2] sm:$0xff]
      %v694 = vpack.c.bf16 %v693, %v693
      %v695 = vld [vmem:[%s639] sm:$0xff]
      %v696 = vld [vmem:[%s639 + $0x8] sm:$0xff]
      %v697 = vld [vmem:[%s639 + $0x10] sm:$0xff]
      %v698 = vld [vmem:[%s639 + $0x18] sm:$0xff]
      %v699 = vld [vmem:[%s639 + $0x20] sm:$0xff]
      %v700 = vld [vmem:[%s639 + $0x28] sm:$0xff]
      %v701 = vld [vmem:[%s639 + $0x30] sm:$0xff]
      %v702 = vld [vmem:[%s639 + $0x38] sm:$0xff]
      %v703 = vld [vmem:[%s643] sm:$0x3]
      %v705 = vlaneseq
      %v706 = vshrl.u32 %v705, 7
      %v707 = vsub.s32 0, %v706
      %v708 = vrot.slane %v703, %v707
      %v709 = vlaneseq
      %v710 = vshrl.u32 %v709, 7
      %v711 = vsub.s32 1, %v710
      %v712 = vrot.slane %v703, %v711
      %v723 = vunpack.c.l.b16 %v695
      %v724 = vunpack.c.h.b16 %v695
      %v725 = vunpack.c.l.b16 %v696
      %v726 = vunpack.c.h.b16 %v696
      %v727 = vunpack.c.l.b16 %v697
      %v728 = vunpack.c.h.b16 %v697
      %v729 = vunpack.c.l.b16 %v698
      %v730 = vunpack.c.h.b16 %v698
      %v731 = vunpack.c.l.b16 %v699
      %v732 = vunpack.c.h.b16 %v699
      %v733 = vunpack.c.l.b16 %v700
      %v734 = vunpack.c.h.b16 %v700
      %v735 = vunpack.c.l.b16 %v701
      %v736 = vunpack.c.h.b16 %v701
      %v737 = vunpack.c.l.b16 %v702
      %v738 = vunpack.c.h.b16 %v702
      %v739 = vpack.c.b16 %v725, %v723
      %v740 = vpack.c.b16 %v726, %v724
      %v741 = vpack.c.b16 %v729, %v727
      %v742 = vpack.c.b16 %v730, %v728
      %v743 = vpack.c.b16 %v733, %v731
      %v744 = vpack.c.b16 %v734, %v732
      %v745 = vpack.c.b16 %v737, %v735
      %v746 = vpack.c.b16 %v738, %v736
      %vm755 = vcmask 523264
      %v757 = vsel %vm755, %v694, 0
      %759 = vmatprep.subr.bf16.mxu0 %v740
      %760 = vmatpush1.bf16.msra.mxu0 %v739
      %761 = vmatprep.subr.bf16.mxu0 %v742
      %762 = vmatpush1.bf16.msra.mxu0 %v741
      %763 = vmatprep.subr.bf16.mxu0 %v744
      %764 = vmatpush1.bf16.msra.mxu0 %v743
      %765 = vmatprep.subr.bf16.mxu0 %v746
      %766 = vmatpush1.bf16.msra.mxu0 %v745
      %767 = vmatprep.subr.bf16.mxu0 0
      %768 = vmatpush1.bf16.msra.mxu0 0
      %769 = vmatprep.subr.bf16.mxu0 0
      %770 = vmatpush1.bf16.msra.mxu0 0
      %771 = vmatprep.subr.bf16.mxu0 0
      %772 = vmatpush1.bf16.msra.mxu0 0
      %773 = vmatprep.subr.bf16.mxu0 0
      %774 = vmatpush1.bf16.msra.mxu0 0
      %775 = vmatprep.subr.bf16.mxu0 0
      %776 = vmatpush1.bf16.msra.mxu0 0
      %777 = vmatprep.subr.bf16.mxu0 0
      %778 = vmatpush1.bf16.msra.mxu0 0
      %779 = vmatprep.subr.bf16.mxu0 0
      %780 = vmatpush1.bf16.msra.mxu0 0
      %781 = vmatprep.subr.bf16.mxu0 0
      %782 = vmatpush1.bf16.msra.mxu0 0
      %783 = vmatprep.subr.bf16.mxu0 0
      %784 = vmatpush1.bf16.msra.mxu0 0
      %785 = vmatprep.subr.bf16.mxu0 0
      %786 = vmatpush1.bf16.msra.mxu0 0
      %787 = vmatprep.subr.bf16.mxu0 0
      %788 = vmatpush1.bf16.msra.mxu0 0
      %789 = vmatprep.subr.bf16.mxu0 0
      %790 = vmatpush1.bf16.msra.mxu0 0
      %791 = vmatprep.mubr.bf16.mxu0 0
      %792 = vmatmul.mubr.bf16.gmra.mrb[0].mxu0 %v757
      %v793 = vpop.f32.mrb[0].mxu0
      %v794 = vadd.f32 %v708, %v793
      %v795 = vpop.f32.mrb[0].mxu0
      %v796 = vadd.f32 %v712, %v795
      %v797 = vpop.f32.mrb[0].mxu0
      %v798 = vpop.f32.mrb[0].mxu0
      %799 = vdwg.mxu0
      %v800 = vld [vmem:[%s634] sm:$0x1]
      %v801 = vsub.f32 1.0, %v800
      %v802 = vmul.f32 %v801, -1e+09
      %v803 = vmul.f32 %v794, 0.25
      %v804 = vld [vmem:[%s648] sm:$0xf]
      %v805 = vld [vmem:[%s648 + $0x4] sm:$0xf]
      %v806 = vld [vmem:[%s648 + $0x8] sm:$0xf]
      %v807 = vld [vmem:[%s648 + $0xc] sm:$0xf]
      %v808 = vld [vmem:[%s648 + $0x10] sm:$0xf]
      %v809 = vld [vmem:[%s648 + $0x14] sm:$0xf]
      %v810 = vld [vmem:[%s648 + $0x18] sm:$0xf]
      %v811 = vld [vmem:[%s648 + $0x1c] sm:$0xf]
      %v812 = vpack.c.bf16 %v803, %v803
      %v813 = vpack.c.bf16 %v794, %v794
      %v814 = vpack.c.bf16 %v796, %v796
      %v816 = vlaneseq
      %v817 = vshrl.u32 %v816, 7
      %v818 = vsub.s32 0, %v817
      %v819 = vrot.slane %v802, %v818
      %822 = vrot.lane.b32.xlu0 %v813, 64
      %v823 = vpop.permute.xlu0 %822
      %vm824 = vcmask 130048
      %v826 = vsel %vm824, %v812, 0
      %v829 = vsel %vm824, %v823, 0
      %831 = vmatprep.subr.bf16.mxu0 0
      %832 = vmatpush1.bf16.xpose.msra.mxu0 %v829
      %833 = vmatprep.subr.bf16.mxu0 0
      %834 = vmatpush1.bf16.xpose.msra.mxu0 0
      %835 = vmatprep.subr.bf16.mxu0 0
      %836 = vmatpush1.bf16.xpose.msra.mxu0 0
      %837 = vmatprep.subr.bf16.mxu0 0
      %838 = vmatpush1.bf16.xpose.msra.mxu0 0
      %839 = vmatprep.subr.bf16.mxu0 0
      %840 = vmatpush1.bf16.xpose.msra.mxu0 0
      %841 = vmatprep.subr.bf16.mxu0 0
      %842 = vmatpush1.bf16.xpose.msra.mxu0 0
      %843 = vmatprep.subr.bf16.mxu0 0
      %844 = vmatpush1.bf16.xpose.msra.mxu0 0
      %845 = vmatprep.subr.bf16.mxu0 0
      %846 = vmatpush1.bf16.xpose.msra.mxu0 0
      %847 = vmatprep.subr.bf16.mxu0 0
      %848 = vmatpush1.bf16.xpose.msra.mxu0 0
      %849 = vmatprep.subr.bf16.mxu0 0
      %850 = vmatpush1.bf16.xpose.msra.mxu0 0
      %851 = vmatprep.subr.bf16.mxu0 0
      %852 = vmatpush1.bf16.xpose.msra.mxu0 0
      %853 = vmatprep.subr.bf16.mxu0 0
      %854 = vmatpush1.bf16.xpose.msra.mxu0 0
      %855 = vmatprep.subr.bf16.mxu0 0
      %856 = vmatpush1.bf16.xpose.msra.mxu0 0
      %857 = vmatprep.subr.bf16.mxu0 0
      %858 = vmatpush1.bf16.xpose.msra.mxu0 0
      %859 = vmatprep.subr.bf16.mxu0 0
      %860 = vmatpush1.bf16.xpose.msra.mxu0 0
      %861 = vmatprep.subr.bf16.mxu0 0
      %862 = vmatpush1.bf16.xpose.msra.mxu0 0
      %863 = vmatprep.mubr.bf16.mxu0 0
      %864 = vmatmul.mubr.bf16.gmra.mrb[0].mxu0 %v826
      %v865 = vpop.f32.mrb[0].mxu0
      %v866 = vadd.f32 %v819, %v865
      %v867 = vpop.f32.mrb[0].mxu0
      %v868 = vpop.f32.mrb[0].mxu0
      %v869 = vpop.f32.mrb[0].mxu0
      %870 = vdwg.mxu0
      %vm871 = vcmask 64512
      %v872 = vsel %vm871, %v866, -inf
      %873 = vmax.xlane.f32.xlu0 %v872
      %v874 = vpop.xlane.xlu0 %873
      %v875 = vsub.f32 %v866, %v874
      %v876 = vmul.f32 %v875, 1.442695
      %v877 = vpow.pop %v876
      %v878 = vsel %vm871, %v877, 0.0
      %879 = vadd.xlane.f32.xlu0 %v878
      %v880 = vpop.xlane.xlu0 %879
      %v881 = vrcp.pop %v880
      %v882 = vmul.f32 %v877, %v881
      %v883 = vpack.c.bf16 %v882, %v882
      %v885 = vsel %vm871, %v883, 0
      %vm887 = vcmask 1043456
      %v889 = vsel %vm887, %v814, 0
      %891 = vmatprep.subr.bf16.mxu0 0
      %892 = vmatpush1.bf16.msra.mxu0 %v889
      %893 = vmatprep.subr.bf16.mxu0 0
      %894 = vmatpush1.bf16.msra.mxu0 0
      %895 = vmatprep.subr.bf16.mxu0 0
      %896 = vmatpush1.bf16.msra.mxu0 0
      %897 = vmatprep.subr.bf16.mxu0 0
      %898 = vmatpush1.bf16.msra.mxu0 0
      %899 = vmatprep.subr.bf16.mxu0 0
      %900 = vmatpush1.bf16.msra.mxu0 0
      %901 = vmatprep.subr.bf16.mxu0 0
      %902 = vmatpush1.bf16.msra.mxu0 0
      %903 = vmatprep.subr.bf16.mxu0 0
      %904 = vmatpush1.bf16.msra.mxu0 0
      %905 = vmatprep.subr.bf16.mxu0 0
      %906 = vmatpush1.bf16.msra.mxu0 0
      %907 = vmatprep.subr.bf16.mxu0 0
      %908 = vmatpush1.bf16.msra.mxu0 0
      %909 = vmatprep.subr.bf16.mxu0 0
      %910 = vmatpush1.bf16.msra.mxu0 0
      %911 = vmatprep.subr.bf16.mxu0 0
      %912 = vmatpush1.bf16.msra.mxu0 0
      %913 = vmatprep.subr.bf16.mxu0 0
      %914 = vmatpush1.bf16.msra.mxu0 0
      %915 = vmatprep.subr.bf16.mxu0 0
      %916 = vmatpush1.bf16.msra.mxu0 0
      %917 = vmatprep.subr.bf16.mxu0 0
      %918 = vmatpush1.bf16.msra.mxu0 0
      %919 = vmatprep.subr.bf16.mxu0 0
      %920 = vmatpush1.bf16.msra.mxu0 0
      %921 = vmatprep.subr.bf16.mxu0 0
      %922 = vmatpush1.bf16.msra.mxu0 0
      %923 = vmatprep.mubr.bf16.mxu0 0
      %924 = vmatmul.mubr.bf16.gmra.mrb[0].mxu0 %v885
      %v925 = vpop.f32.mrb[0].mxu0
      %v926 = vadd.f32 0.0, %v925
      %v927 = vpop.f32.mrb[0].mxu0
      %v928 = vpop.f32.mrb[0].mxu0
      %v929 = vpop.f32.mrb[0].mxu0
      %930 = vdwg.mxu0
      %v931 = vpack.c.bf16 %v926, %v926
      %933 = vrot.lane.b32.xlu0 %v812, 112
      %v934 = vpop.permute.xlu0 %933
      %935 = vrot.lane.b32.xlu0 %v813, 48
      %v936 = vpop.permute.xlu0 %935
      %v938 = vsel %vm824, %v934, 0
      %v941 = vsel %vm824, %v936, 0
      %943 = vmatprep.subr.bf16.mxu0 0
      %944 = vmatpush1.bf16.xpose.msra.mxu0 %v941
      %945 = vmatprep.subr.bf16.mxu0 0
      %946 = vmatpush1.bf16.xpose.msra.mxu0 0
      %947 = vmatprep.subr.bf16.mxu0 0
      %948 = vmatpush1.bf16.xpose.msra.mxu0 0
      %949 = vmatprep.subr.bf16.mxu0 0
      %950 = vmatpush1.bf16.xpose.msra.mxu0 0
      %951 = vmatprep.subr.bf16.mxu0 0
      %952 = vmatpush1.bf16.xpose.msra.mxu0 0
      %953 = vmatprep.subr.bf16.mxu0 0
      %954 = vmatpush1.bf16.xpose.msra.mxu0 0
      %955 = vmatprep.subr.bf16.mxu0 0
      %956 = vmatpush1.bf16.xpose.msra.mxu0 0
      %957 = vmatprep.subr.bf16.mxu0 0
      %958 = vmatpush1.bf16.xpose.msra.mxu0 0
      %959 = vmatprep.subr.bf16.mxu0 0
      %960 = vmatpush1.bf16.xpose.msra.mxu0 0
      %961 = vmatprep.subr.bf16.mxu0 0
      %962 = vmatpush1.bf16.xpose.msra.mxu0 0
      %963 = vmatprep.subr.bf16.mxu0 0
      %964 = vmatpush1.bf16.xpose.msra.mxu0 0
      %965 = vmatprep.subr.bf16.mxu0 0
      %966 = vmatpush1.bf16.xpose.msra.mxu0 0
      %967 = vmatprep.subr.bf16.mxu0 0
      %968 = vmatpush1.bf16.xpose.msra.mxu0 0
      %969 = vmatprep.subr.bf16.mxu0 0
      %970 = vmatpush1.bf16.xpose.msra.mxu0 0
      %971 = vmatprep.subr.bf16.mxu0 0
      %972 = vmatpush1.bf16.xpose.msra.mxu0 0
      %973 = vmatprep.subr.bf16.mxu0 0
      %974 = vmatpush1.bf16.xpose.msra.mxu0 0
      %975 = vmatprep.mubr.bf16.mxu0 0
      %976 = vmatmul.mubr.bf16.gmra.mrb[0].mxu0 %v938
      %v977 = vpop.f32.mrb[0].mxu0
      %v978 = vadd.f32 %v819, %v977
      %v979 = vpop.f32.mrb[0].mxu0
      %v980 = vpop.f32.mrb[0].mxu0
      %v981 = vpop.f32.mrb[0].mxu0
      %982 = vdwg.mxu0
      %v983 = vsel %vm871, %v978, -inf
      %984 = vmax.xlane.f32.xlu0 %v983
      %v985 = vpop.xlane.xlu0 %984
      %v986 = vsub.f32 %v978, %v985
      %v987 = vmul.f32 %v986, 1.442695
      %v988 = vpow.pop %v987
      %v989 = vsel %vm871, %v988, 0.0
      %990 = vadd.xlane.f32.xlu0 %v989
      %v991 = vpop.xlane.xlu0 %990
      %v992 = vrcp.pop %v991
      %v993 = vmul.f32 %v988, %v992
      %v994 = vpack.c.bf16 %v993, %v993
      %996 = vrot.lane.b32.xlu0 %v814, 112
      %v997 = vpop.permute.xlu0 %996
      %v999 = vsel %vm871, %v994, 0
      %v1002 = vsel %vm887, %v997, 0
      %1004 = vmatprep.subr.bf16.mxu0 0
      %1005 = vmatpush1.bf16.msra.mxu0 %v1002
      %1006 = vmatprep.subr.bf16.mxu0 0
      %1007 = vmatpush1.bf16.msra.mxu0 0
      %1008 = vmatprep.subr.bf16.mxu0 0
      %1009 = vmatpush1.bf16.msra.mxu0 0
      %1010 = vmatprep.subr.bf16.mxu0 0
      %1011 = vmatpush1.bf16.msra.mxu0 0
      %1012 = vmatprep.subr.bf16.mxu0 0
      %1013 = vmatpush1.bf16.msra.mxu0 0
      %1014 = vmatprep.subr.bf16.mxu0 0
      %1015 = vmatpush1.bf16.msra.mxu0 0
      %1016 = vmatprep.subr.bf16.mxu0 0
      %1017 = vmatpush1.bf16.msra.mxu0 0
      %1018 = vmatprep.subr.bf16.mxu0 0
      %1019 = vmatpush1.bf16.msra.mxu0 0
      %1020 = vmatprep.subr.bf16.mxu0 0
      %1021 = vmatpush1.bf16.msra.mxu0 0
      %1022 = vmatprep.subr.bf16.mxu0 0
      %1023 = vmatpush1.bf16.msra.mxu0 0
      %1024 = vmatprep.subr.bf16.mxu0 0
      %1025 = vmatpush1.bf16.msra.mxu0 0
      %1026 = vmatprep.subr.bf16.mxu0 0
      %1027 = vmatpush1.bf16.msra.mxu0 0
      %1028 = vmatprep.subr.bf16.mxu0 0
      %1029 = vmatpush1.bf16.msra.mxu0 0
      %1030 = vmatprep.subr.bf16.mxu0 0
      %1031 = vmatpush1.bf16.msra.mxu0 0
      %1032 = vmatprep.subr.bf16.mxu0 0
      %1033 = vmatpush1.bf16.msra.mxu0 0
      %1034 = vmatprep.subr.bf16.mxu0 0
      %1035 = vmatpush1.bf16.msra.mxu0 0
      %1036 = vmatprep.mubr.bf16.mxu0 0
      %1037 = vmatmul.mubr.bf16.gmra.mrb[0].mxu0 %v999
      %v1038 = vpop.f32.mrb[0].mxu0
      %v1039 = vadd.f32 0.0, %v1038
      %v1040 = vpop.f32.mrb[0].mxu0
      %v1041 = vpop.f32.mrb[0].mxu0
      %v1042 = vpop.f32.mrb[0].mxu0
      %1043 = vdwg.mxu0
      %v1044 = vpack.c.bf16 %v1039, %v1039
      %v1047 = vunpack.c.l.b16 %v806
      %v1048 = vunpack.c.l.b16 %v807
      %v1049 = vpack.c.b16 %v1048, %v1047
      %v1052 = vsel %vm824, %v1044, 0
      %1054 = vmatprep.subr.bf16.mxu0 0
      %1055 = vmatpush1.bf16.msra.mxu0 %v1049
      %1056 = vmatprep.subr.bf16.mxu0 0
      %1057 = vmatpush1.bf16.msra.mxu0 0
      %1058 = vmatprep.subr.bf16.mxu0 0
      %1059 = vmatpush1.bf16.msra.mxu0 0
      %1060 = vmatprep.subr.bf16.mxu0 0
      %1061 = vmatpush1.bf16.msra.mxu0 0
      %1062 = vmatprep.subr.bf16.mxu0 0
      %1063 = vmatpush1.bf16.msra.mxu0 0
      %1064 = vmatprep.subr.bf16.mxu0 0
      %1065 = vmatpush1.bf16.msra.mxu0 0
      %1066 = vmatprep.subr.bf16.mxu0 0
      %1067 = vmatpush1.bf16.msra.mxu0 0
      %1068 = vmatprep.subr.bf16.mxu0 0
      %1069 = vmatpush1.bf16.msra.mxu0 0
      %1070 = vmatprep.subr.bf16.mxu0 0
      %1071 = vmatpush1.bf16.msra.mxu0 0
      %1072 = vmatprep.subr.bf16.mxu0 0
      %1073 = vmatpush1.bf16.msra.mxu0 0
      %1074 = vmatprep.subr.bf16.mxu0 0
      %1075 = vmatpush1.bf16.msra.mxu0 0
      %1076 = vmatprep.subr.bf16.mxu0 0
      %1077 = vmatpush1.bf16.msra.mxu0 0
      %1078 = vmatprep.subr.bf16.mxu0 0
      %1079 = vmatpush1.bf16.msra.mxu0 0
      %1080 = vmatprep.subr.bf16.mxu0 0
      %1081 = vmatpush1.bf16.msra.mxu0 0
      %1082 = vmatprep.subr.bf16.mxu0 0
      %1083 = vmatpush1.bf16.msra.mxu0 0
      %1084 = vmatprep.subr.bf16.mxu0 0
      %1085 = vmatpush1.bf16.msra.mxu0 0
      %1086 = vmatprep.mubr.bf16.mxu0 0
      %1087 = vmatmul.mubr.bf16.gmra.mrb[0].mxu0 %v1052
      %v1088 = vpop.f32.mrb[0].mxu0
      %v1089 = vadd.f32 0.0, %v1088
      %v1090 = vpop.f32.mrb[0].mxu0
      %v1091 = vpop.f32.mrb[0].mxu0
      %v1092 = vpop.f32.mrb[0].mxu0
      %1093 = vdwg.mxu0
      %v1096 = vunpack.c.l.b16 %v804
      %v1097 = vunpack.c.l.b16 %v805
      %v1098 = vpack.c.b16 %v1097, %v1096
      %v1101 = vsel %vm824, %v931, 0
      %1103 = vmatprep.subr.bf16.mxu0 0
      %1104 = vmatpush1.bf16.msra.mxu0 %v1098
      %1105 = vmatprep.subr.bf16.mxu0 0
      %1106 = vmatpush1.bf16.msra.mxu0 0
      %1107 = vmatprep.subr.bf16.mxu0 0
      %1108 = vmatpush1.bf16.msra.mxu0 0
      %1109 = vmatprep.subr.bf16.mxu0 0
      %1110 = vmatpush1.bf16.msra.mxu0 0
      %1111 = vmatprep.subr.bf16.mxu0 0
      %1112 = vmatpush1.bf16.msra.mxu0 0
      %1113 = vmatprep.subr.bf16.mxu0 0
      %1114 = vmatpush1.bf16.msra.mxu0 0
      %1115 = vmatprep.subr.bf16.mxu0 0
      %1116 = vmatpush1.bf16.msra.mxu0 0
      %1117 = vmatprep.subr.bf16.mxu0 0
      %1118 = vmatpush1.bf16.msra.mxu0 0
      %1119 = vmatprep.subr.bf16.mxu0 0
      %1120 = vmatpush1.bf16.msra.mxu0 0
      %1121 = vmatprep.subr.bf16.mxu0 0
      %1122 = vmatpush1.bf16.msra.mxu0 0
      %1123 = vmatprep.subr.bf16.mxu0 0
      %1124 = vmatpush1.bf16.msra.mxu0 0
      %1125 = vmatprep.subr.bf16.mxu0 0
      %1126 = vmatpush1.bf16.msra.mxu0 0
      %1127 = vmatprep.subr.bf16.mxu0 0
      %1128 = vmatpush1.bf16.msra.mxu0 0
      %1129 = vmatprep.subr.bf16.mxu0 0
      %1130 = vmatpush1.bf16.msra.mxu0 0
      %1131 = vmatprep.subr.bf16.mxu0 0
      %1132 = vmatpush1.bf16.msra.mxu0 0
      %1133 = vmatprep.subr.bf16.mxu0 0
      %1134 = vmatpush1.bf16.msra.mxu0 0
      %1135 = vmatprep.mubr.bf16.mxu0 0
      %1136 = vmatmul.mubr.bf16.gmra.mrb[0].mxu0 %v1101
      %v1137 = vpop.f32.mrb[0].mxu0
      %v1138 = vadd.f32 %v1089, %v1137
      %v1139 = vpop.f32.mrb[0].mxu0
      %v1140 = vpop.f32.mrb[0].mxu0
      %v1141 = vpop.f32.mrb[0].mxu0
      %1142 = vdwg.mxu0
      %1143 = vrot.lane.b32.xlu0 %v812, 96
      %v1144 = vpop.permute.xlu0 %1143
      %1145 = vrot.lane.b32.xlu0 %v813, 32
      %v1146 = vpop.permute.xlu0 %1145
      %v1148 = vsel %vm824, %v1144, 0
      %v1151 = vsel %vm824, %v1146, 0
      %1153 = vmatprep.subr.bf16.mxu0 0
      %1154 = vmatpush1.bf16.xpose.msra.mxu0 %v1151
      %1155 = vmatprep.subr.bf16.mxu0 0
      %1156 = vmatpush1.bf16.xpose.msra.mxu0 0
      %1157 = vmatprep.subr.bf16.mxu0 0
      %1158 = vmatpush1.bf16.xpose.msra.mxu0 0
      %1159 = vmatprep.subr.bf16.mxu0 0
      %1160 = vmatpush1.bf16.xpose.msra.mxu0 0
      %1161 = vmatprep.subr.bf16.mxu0 0
      %1162 = vmatpush1.bf16.xpose.msra.mxu0 0
      %1163 = vmatprep.subr.bf16.mxu0 0
      %1164 = vmatpush1.bf16.xpose.msra.mxu0 0
      %1165 = vmatprep.subr.bf16.mxu0 0
      %1166 = vmatpush1.bf16.xpose.msra.mxu0 0
      %1167 = vmatprep.subr.bf16.mxu0 0
      %1168 = vmatpush1.bf16.xpose.msra.mxu0 0
      %1169 = vmatprep.subr.bf16.mxu0 0
      %1170 = vmatpush1.bf16.xpose.msra.mxu0 0
      %1171 = vmatprep.subr.bf16.mxu0 0
      %1172 = vmatpush1.bf16.xpose.msra.mxu0 0
      %1173 = vmatprep.subr.bf16.mxu0 0
      %1174 = vmatpush1.bf16.xpose.msra.mxu0 0
      %1175 = vmatprep.subr.bf16.mxu0 0
      %1176 = vmatpush1.bf16.xpose.msra.mxu0 0
      %1177 = vmatprep.subr.bf16.mxu0 0
      %1178 = vmatpush1.bf16.xpose.msra.mxu0 0
      %1179 = vmatprep.subr.bf16.mxu0 0
      %1180 = vmatpush1.bf16.xpose.msra.mxu0 0
      %1181 = vmatprep.subr.bf16.mxu0 0
      %1182 = vmatpush1.bf16.xpose.msra.mxu0 0
      %1183 = vmatprep.subr.bf16.mxu0 0
      %1184 = vmatpush1.bf16.xpose.msra.mxu0 0
      %1185 = vmatprep.mubr.bf16.mxu0 0
      %1186 = vmatmul.mubr.bf16.gmra.mrb[0].mxu0 %v1148
      %v1187 = vpop.f32.mrb[0].mxu0
      %v1188 = vadd.f32 %v819, %v1187
      %v1189 = vpop.f32.mrb[0].mxu0
      %v1190 = vpop.f32.mrb[0].mxu0
      %v1191 = vpop.f32.mrb[0].mxu0
      %1192 = vdwg.mxu0
      %v1193 = vsel %vm871, %v1188, -inf
      %1194 = vmax.xlane.f32.xlu0 %v1193
      %v1195 = vpop.xlane.xlu0 %1194
      %v1196 = vsub.f32 %v1188, %v1195
      %v1197 = vmul.f32 %v1196, 1.442695
      %v1198 = vpow.pop %v1197
      %v1199 = vsel %vm871, %v1198, 0.0
      %1200 = vadd.xlane.f32.xlu0 %v1199
      %v1201 = vpop.xlane.xlu0 %1200
      %v1202 = vrcp.pop %v1201
      %v1203 = vmul.f32 %v1198, %v1202
      %v1204 = vpack.c.bf16 %v1203, %v1203
      %1205 = vrot.lane.b32.xlu0 %v814, 96
      %v1206 = vpop.permute.xlu0 %1205
      %v1208 = vsel %vm871, %v1204, 0
      %v1211 = vsel %vm887, %v1206, 0
      %1213 = vmatprep.subr.bf16.mxu0 0
      %1214 = vmatpush1.bf16.msra.mxu0 %v1211
      %1215 = vmatprep.subr.bf16.mxu0 0
      %1216 = vmatpush1.bf16.msra.mxu0 0
      %1217 = vmatprep.subr.bf16.mxu0 0
      %1218 = vmatpush1.bf16.msra.mxu0 0
      %1219 = vmatprep.subr.bf16.mxu0 0
      %1220 = vmatpush1.bf16.msra.mxu0 0
      %1221 = vmatprep.subr.bf16.mxu0 0
      %1222 = vmatpush1.bf16.msra.mxu0 0
      %1223 = vmatprep.subr.bf16.mxu0 0
      %1224 = vmatpush1.bf16.msra.mxu0 0
      %1225 = vmatprep.subr.bf16.mxu0 0
      %1226 = vmatpush1.bf16.msra.mxu0 0
      %1227 = vmatprep.subr.bf16.mxu0 0
      %1228 = vmatpush1.bf16.msra.mxu0 0
      %1229 = vmatprep.subr.bf16.mxu0 0
      %1230 = vmatpush1.bf16.msra.mxu0 0
      %1231 = vmatprep.subr.bf16.mxu0 0
      %1232 = vmatpush1.bf16.msra.mxu0 0
      %1233 = vmatprep.subr.bf16.mxu0 0
      %1234 = vmatpush1.bf16.msra.mxu0 0
      %1235 = vmatprep.subr.bf16.mxu0 0
      %1236 = vmatpush1.bf16.msra.mxu0 0
      %1237 = vmatprep.subr.bf16.mxu0 0
      %1238 = vmatpush1.bf16.msra.mxu0 0
      %1239 = vmatprep.subr.bf16.mxu0 0
      %1240 = vmatpush1.bf16.msra.mxu0 0
      %1241 = vmatprep.subr.bf16.mxu0 0
      %1242 = vmatpush1.bf16.msra.mxu0 0
      %1243 = vmatprep.subr.bf16.mxu0 0
      %1244 = vmatpush1.bf16.msra.mxu0 0
      %1245 = vmatprep.mubr.bf16.mxu0 0
      %1246 = vmatmul.mubr.bf16.gmra.mrb[0].mxu0 %v1208
      %v1247 = vpop.f32.mrb[0].mxu0
      %v1248 = vadd.f32 0.0, %v1247
      %v1249 = vpop.f32.mrb[0].mxu0
      %v1250 = vpop.f32.mrb[0].mxu0
      %v1251 = vpop.f32.mrb[0].mxu0
      %1252 = vdwg.mxu0
      %v1253 = vpack.c.bf16 %v1248, %v1248
      %v1256 = vunpack.c.l.b16 %v808
      %v1257 = vunpack.c.l.b16 %v809
      %v1258 = vpack.c.b16 %v1257, %v1256
      %v1261 = vsel %vm824, %v1253, 0
      %1263 = vmatprep.subr.bf16.mxu0 0
      %1264 = vmatpush1.bf16.msra.mxu0 %v1258
      %1265 = vmatprep.subr.bf16.mxu0 0
      %1266 = vmatpush1.bf16.msra.mxu0 0
      %1267 = vmatprep.subr.bf16.mxu0 0
      %1268 = vmatpush1.bf16.msra.mxu0 0
      %1269 = vmatprep.subr.bf16.mxu0 0
      %1270 = vmatpush1.bf16.msra.mxu0 0
      %1271 = vmatprep.subr.bf16.mxu0 0
      %1272 = vmatpush1.bf16.msra.mxu0 0
      %1273 = vmatprep.subr.bf16.mxu0 0
      %1274 = vmatpush1.bf16.msra.mxu0 0
      %1275 = vmatprep.subr.bf16.mxu0 0
      %1276 = vmatpush1.bf16.msra.mxu0 0
      %1277 = vmatprep.subr.bf16.mxu0 0
      %1278 = vmatpush1.bf16.msra.mxu0 0
      %1279 = vmatprep.subr.bf16.mxu0 0
      %1280 = vmatpush1.bf16.msra.mxu0 0
      %1281 = vmatprep.subr.bf16.mxu0 0
      %1282 = vmatpush1.bf16.msra.mxu0 0
      %1283 = vmatprep.subr.bf16.mxu0 0
      %1284 = vmatpush1.bf16.msra.mxu0 0
      %1285 = vmatprep.subr.bf16.mxu0 0
      %1286 = vmatpush1.bf16.msra.mxu0 0
      %1287 = vmatprep.subr.bf16.mxu0 0
      %1288 = vmatpush1.bf16.msra.mxu0 0
      %1289 = vmatprep.subr.bf16.mxu0 0
      %1290 = vmatpush1.bf16.msra.mxu0 0
      %1291 = vmatprep.subr.bf16.mxu0 0
      %1292 = vmatpush1.bf16.msra.mxu0 0
      %1293 = vmatprep.subr.bf16.mxu0 0
      %1294 = vmatpush1.bf16.msra.mxu0 0
      %1295 = vmatprep.mubr.bf16.mxu0 0
      %1296 = vmatmul.mubr.bf16.gmra.mrb[0].mxu0 %v1261
      %v1297 = vpop.f32.mrb[0].mxu0
      %v1298 = vadd.f32 0.0, %v1297
      %v1299 = vpop.f32.mrb[0].mxu0
      %v1300 = vpop.f32.mrb[0].mxu0
      %v1301 = vpop.f32.mrb[0].mxu0
      %1302 = vdwg.mxu0
      %v1303 = vadd.f32 %v1138, %v1298
      %1304 = vrot.lane.b32.xlu0 %v812, 80
      %v1305 = vpop.permute.xlu0 %1304
      %1306 = vrot.lane.b32.xlu0 %v813, 16
      %v1307 = vpop.permute.xlu0 %1306
      %v1309 = vsel %vm824, %v1305, 0
      %v1312 = vsel %vm824, %v1307, 0
      %1314 = vmatprep.subr.bf16.mxu0 0
      %1315 = vmatpush1.bf16.xpose.msra.mxu0 %v1312
      %1316 = vmatprep.subr.bf16.mxu0 0
      %1317 = vmatpush1.bf16.xpose.msra.mxu0 0
      %1318 = vmatprep.subr.bf16.mxu0 0
      %1319 = vmatpush1.bf16.xpose.msra.mxu0 0
      %1320 = vmatprep.subr.bf16.mxu0 0
      %1321 = vmatpush1.bf16.xpose.msra.mxu0 0
      %1322 = vmatprep.subr.bf16.mxu0 0
      %1323 = vmatpush1.bf16.xpose.msra.mxu0 0
      %1324 = vmatprep.subr.bf16.mxu0 0
      %1325 = vmatpush1.bf16.xpose.msra.mxu0 0
      %1326 = vmatprep.subr.bf16.mxu0 0
      %1327 = vmatpush1.bf16.xpose.msra.mxu0 0
      %1328 = vmatprep.subr.bf16.mxu0 0
      %1329 = vmatpush1.bf16.xpose.msra.mxu0 0
      %1330 = vmatprep.subr.bf16.mxu0 0
      %1331 = vmatpush1.bf16.xpose.msra.mxu0 0
      %1332 = vmatprep.subr.bf16.mxu0 0
      %1333 = vmatpush1.bf16.xpose.msra.mxu0 0
      %1334 = vmatprep.subr.bf16.mxu0 0
      %1335 = vmatpush1.bf16.xpose.msra.mxu0 0
      %1336 = vmatprep.subr.bf16.mxu0 0
      %1337 = vmatpush1.bf16.xpose.msra.mxu0 0
      %1338 = vmatprep.subr.bf16.mxu0 0
      %1339 = vmatpush1.bf16.xpose.msra.mxu0 0
      %1340 = vmatprep.subr.bf16.mxu0 0
      %1341 = vmatpush1.bf16.xpose.msra.mxu0 0
      %1342 = vmatprep.subr.bf16.mxu0 0
      %1343 = vmatpush1.bf16.xpose.msra.mxu0 0
      %1344 = vmatprep.subr.bf16.mxu0 0
      %1345 = vmatpush1.bf16.xpose.msra.mxu0 0
      %1346 = vmatprep.mubr.bf16.mxu0 0
      %1347 = vmatmul.mubr.bf16.gmra.mrb[0].mxu0 %v1309
      %v1348 = vpop.f32.mrb[0].mxu0
      %v1349 = vadd.f32 %v819, %v1348
      %v1350 = vpop.f32.mrb[0].mxu0
      %v1351 = vpop.f32.mrb[0].mxu0
      %v1352 = vpop.f32.mrb[0].mxu0
      %1353 = vdwg.mxu0
      %v1354 = vsel %vm871, %v1349, -inf
      %1355 = vmax.xlane.f32.xlu0 %v1354
      %v1356 = vpop.xlane.xlu0 %1355
      %v1357 = vsub.f32 %v1349, %v1356
      %v1358 = vmul.f32 %v1357, 1.442695
      %v1359 = vpow.pop %v1358
      %v1360 = vsel %vm871, %v1359, 0.0
      %1361 = vadd.xlane.f32.xlu0 %v1360
      %v1362 = vpop.xlane.xlu0 %1361
      %v1363 = vrcp.pop %v1362
      %v1364 = vmul.f32 %v1359, %v1363
      %v1365 = vpack.c.bf16 %v1364, %v1364
      %1366 = vrot.lane.b32.xlu0 %v814, 80
      %v1367 = vpop.permute.xlu0 %1366
      %v1369 = vsel %vm871, %v1365, 0
      %v1372 = vsel %vm887, %v1367, 0
      %1374 = vmatprep.subr.bf16.mxu0 0
      %1375 = vmatpush1.bf16.msra.mxu0 %v1372
      %1376 = vmatprep.subr.bf16.mxu0 0
      %1377 = vmatpush1.bf16.msra.mxu0 0
      %1378 = vmatprep.subr.bf16.mxu0 0
      %1379 = vmatpush1.bf16.msra.mxu0 0
      %1380 = vmatprep.subr.bf16.mxu0 0
      %1381 = vmatpush1.bf16.msra.mxu0 0
      %1382 = vmatprep.subr.bf16.mxu0 0
      %1383 = vmatpush1.bf16.msra.mxu0 0
      %1384 = vmatprep.subr.bf16.mxu0 0
      %1385 = vmatpush1.bf16.msra.mxu0 0
      %1386 = vmatprep.subr.bf16.mxu0 0
      %1387 = vmatpush1.bf16.msra.mxu0 0
      %1388 = vmatprep.subr.bf16.mxu0 0
      %1389 = vmatpush1.bf16.msra.mxu0 0
      %1390 = vmatprep.subr.bf16.mxu0 0
      %1391 = vmatpush1.bf16.msra.mxu0 0
      %1392 = vmatprep.subr.bf16.mxu0 0
      %1393 = vmatpush1.bf16.msra.mxu0 0
      %1394 = vmatprep.subr.bf16.mxu0 0
      %1395 = vmatpush1.bf16.msra.mxu0 0
      %1396 = vmatprep.subr.bf16.mxu0 0
      %1397 = vmatpush1.bf16.msra.mxu0 0
      %1398 = vmatprep.subr.bf16.mxu0 0
      %1399 = vmatpush1.bf16.msra.mxu0 0
      %1400 = vmatprep.subr.bf16.mxu0 0
      %1401 = vmatpush1.bf16.msra.mxu0 0
      %1402 = vmatprep.subr.bf16.mxu0 0
      %1403 = vmatpush1.bf16.msra.mxu0 0
      %1404 = vmatprep.subr.bf16.mxu0 0
      %1405 = vmatpush1.bf16.msra.mxu0 0
      %1406 = vmatprep.mubr.bf16.mxu0 0
      %1407 = vmatmul.mubr.bf16.gmra.mrb[0].mxu0 %v1369
      %v1408 = vpop.f32.mrb[0].mxu0
      %v1409 = vadd.f32 0.0, %v1408
      %v1410 = vpop.f32.mrb[0].mxu0
      %v1411 = vpop.f32.mrb[0].mxu0
      %v1412 = vpop.f32.mrb[0].mxu0
      %1413 = vdwg.mxu0
      %v1414 = vpack.c.bf16 %v1409, %v1409
      %v1417 = vunpack.c.l.b16 %v810
      %v1418 = vunpack.c.l.b16 %v811
      %v1419 = vpack.c.b16 %v1418, %v1417
      %v1422 = vsel %vm824, %v1414, 0
      %1424 = vmatprep.subr.bf16.mxu0 0
      %1425 = vmatpush1.bf16.msra.mxu0 %v1419
      %1426 = vmatprep.subr.bf16.mxu0 0
      %1427 = vmatpush1.bf16.msra.mxu0 0
      %1428 = vmatprep.subr.bf16.mxu0 0
      %1429 = vmatpush1.bf16.msra.mxu0 0
      %1430 = vmatprep.subr.bf16.mxu0 0
      %1431 = vmatpush1.bf16.msra.mxu0 0
      %1432 = vmatprep.subr.bf16.mxu0 0
      %1433 = vmatpush1.bf16.msra.mxu0 0
      %1434 = vmatprep.subr.bf16.mxu0 0
      %1435 = vmatpush1.bf16.msra.mxu0 0
      %1436 = vmatprep.subr.bf16.mxu0 0
      %1437 = vmatpush1.bf16.msra.mxu0 0
      %1438 = vmatprep.subr.bf16.mxu0 0
      %1439 = vmatpush1.bf16.msra.mxu0 0
      %1440 = vmatprep.subr.bf16.mxu0 0
      %1441 = vmatpush1.bf16.msra.mxu0 0
      %1442 = vmatprep.subr.bf16.mxu0 0
      %1443 = vmatpush1.bf16.msra.mxu0 0
      %1444 = vmatprep.subr.bf16.mxu0 0
      %1445 = vmatpush1.bf16.msra.mxu0 0
      %1446 = vmatprep.subr.bf16.mxu0 0
      %1447 = vmatpush1.bf16.msra.mxu0 0
      %1448 = vmatprep.subr.bf16.mxu0 0
      %1449 = vmatpush1.bf16.msra.mxu0 0
      %1450 = vmatprep.subr.bf16.mxu0 0
      %1451 = vmatpush1.bf16.msra.mxu0 0
      %1452 = vmatprep.subr.bf16.mxu0 0
      %1453 = vmatpush1.bf16.msra.mxu0 0
      %1454 = vmatprep.subr.bf16.mxu0 0
      %1455 = vmatpush1.bf16.msra.mxu0 0
      %1456 = vmatprep.mubr.bf16.mxu0 0
      %1457 = vmatmul.mubr.bf16.gmra.mrb[0].mxu0 %v1422
      %v1458 = vpop.f32.mrb[0].mxu0
      %v1459 = vadd.f32 0.0, %v1458
      %v1460 = vpop.f32.mrb[0].mxu0
      %v1461 = vpop.f32.mrb[0].mxu0
      %v1462 = vpop.f32.mrb[0].mxu0
      %1463 = vdwg.mxu0
      %v1464 = vadd.f32 %v1303, %v1459
      %v1465 = vld [vmem:[%s651] sm:$0x1]
      %v1467 = vlaneseq
      %v1468 = vshrl.u32 %v1467, 7
      %v1469 = vsub.s32 0, %v1468
      %v1470 = vrot.slane %v1465, %v1469
      %v1472 = vadd.f32 %v1464, %v1470
      %v1473 = vadd.f32 %v1472, %v693
      %v1474 = vld [vmem:[%s654] sm:$0x1]
      %v1475 = vld [vmem:[%s657] sm:$0x1]
      %v1476 = vsel %vm755, %v1473, 0.0
      %1477 = vadd.xlane.f32.xlu0 %v1476
      %v1478 = vpop.xlane.xlu0 %1477
      %v1479 = vrcp.pop 64.0
      %v1480 = vmul.f32 %v1478, %v1479
      %v1481 = vsub.f32 %v1473, %v1480
      %v1482 = vmul.f32 %v1481, %v1481
      %v1483 = vsel %vm755, %v1482, 0.0
      %1484 = vadd.xlane.f32.xlu0 %v1483
      %v1485 = vpop.xlane.xlu0 %1484
      %v1486 = vmul.f32 %v1485, %v1479
      %v1487 = vadd.f32 %v1486, 1e-12
      %v1488 = vrsqrt.pop %v1487
      %v1489 = vmul.f32 %v1481, %v1488
      %v1491 = vlaneseq
      %v1492 = vshrl.u32 %v1491, 7
      %v1493 = vsub.s32 0, %v1492
      %v1494 = vrot.slane %v1474, %v1493
      %v1496 = vmul.f32 %v1489, %v1494
      %v1498 = vlaneseq
      %v1499 = vshrl.u32 %v1498, 7
      %v1500 = vsub.s32 0, %v1499
      %v1501 = vrot.slane %v1475, %v1500
      %v1503 = vadd.f32 %v1496, %v1501
      %v1504 = vpack.c.bf16 %v1503, %v1503
      %v1505 = vld [vmem:[%s662] sm:$0xf]
      %v1506 = vld [vmem:[%s662 + $0x4] sm:$0xf]
      %v1507 = vld [vmem:[%s662 + $0x8] sm:$0xf]
      %v1508 = vld [vmem:[%s662 + $0xc] sm:$0xf]
      %v1509 = vld [vmem:[%s662 + $0x10] sm:$0xf]
      %v1510 = vld [vmem:[%s662 + $0x14] sm:$0xf]
      %v1511 = vld [vmem:[%s662 + $0x18] sm:$0xf]
      %v1512 = vld [vmem:[%s662 + $0x1c] sm:$0xf]
      %v1513 = vld [vmem:[%s665] sm:$0x1]
      %v1515 = vlaneseq
      %v1516 = vshrl.u32 %v1515, 7
      %v1517 = vsub.s32 0, %v1516
      %v1518 = vrot.slane %v1513, %v1517
      %v1528 = vunpack.c.l.b16 %v1505
      %v1529 = vunpack.c.l.b16 %v1506
      %v1530 = vunpack.c.l.b16 %v1507
      %v1531 = vunpack.c.l.b16 %v1508
      %v1532 = vunpack.c.l.b16 %v1509
      %v1533 = vunpack.c.l.b16 %v1510
      %v1534 = vunpack.c.l.b16 %v1511
      %v1535 = vunpack.c.l.b16 %v1512
      %v1536 = vpack.c.b16 %v1529, %v1528
      %v1537 = vpack.c.b16 %v1531, %v1530
      %v1538 = vpack.c.b16 %v1533, %v1532
      %v1539 = vpack.c.b16 %v1535, %v1534
      %v1545 = vsel %vm755, %v1504, 0
      %1547 = vmatprep.subr.bf16.mxu0 0
      %1548 = vmatpush1.bf16.msra.mxu0 %v1536
      %1549 = vmatprep.subr.bf16.mxu0 0
      %1550 = vmatpush1.bf16.msra.mxu0 %v1537
      %1551 = vmatprep.subr.bf16.mxu0 0
      %1552 = vmatpush1.bf16.msra.mxu0 %v1538
      %1553 = vmatprep.subr.bf16.mxu0 0
      %1554 = vmatpush1.bf16.msra.mxu0 %v1539
      %1555 = vmatprep.subr.bf16.mxu0 0
      %1556 = vmatpush1.bf16.msra.mxu0 0
      %1557 = vmatprep.subr.bf16.mxu0 0
      %1558 = vmatpush1.bf16.msra.mxu0 0
      %1559 = vmatprep.subr.bf16.mxu0 0
      %1560 = vmatpush1.bf16.msra.mxu0 0
      %1561 = vmatprep.subr.bf16.mxu0 0
      %1562 = vmatpush1.bf16.msra.mxu0 0
      %1563 = vmatprep.subr.bf16.mxu0 0
      %1564 = vmatpush1.bf16.msra.mxu0 0
      %1565 = vmatprep.subr.bf16.mxu0 0
      %1566 = vmatpush1.bf16.msra.mxu0 0
      %1567 = vmatprep.subr.bf16.mxu0 0
      %1568 = vmatpush1.bf16.msra.mxu0 0
      %1569 = vmatprep.subr.bf16.mxu0 0
      %1570 = vmatpush1.bf16.msra.mxu0 0
      %1571 = vmatprep.subr.bf16.mxu0 0
      %1572 = vmatpush1.bf16.msra.mxu0 0
      %1573 = vmatprep.subr.bf16.mxu0 0
      %1574 = vmatpush1.bf16.msra.mxu0 0
      %1575 = vmatprep.subr.bf16.mxu0 0
      %1576 = vmatpush1.bf16.msra.mxu0 0
      %1577 = vmatprep.subr.bf16.mxu0 0
      %1578 = vmatpush1.bf16.msra.mxu0 0
      %1579 = vmatprep.mubr.bf16.mxu0 0
      %1580 = vmatmul.mubr.bf16.gmra.mrb[0].mxu0 %v1545
      %v1581 = vpop.f32.mrb[0].mxu0
      %v1582 = vadd.f32 %v1518, %v1581
      %v1583 = vpop.f32.mrb[0].mxu0
      %v1584 = vpop.f32.mrb[0].mxu0
      %v1585 = vpop.f32.mrb[0].mxu0
      %1586 = vdwg.mxu0
      %v1587 = vmul.f32 %v1582, 0.5
      %v1588 = vmul.f32 %v1582, 0.044715
      %v1589 = vmul.f32 %v1588, %v1582
      %v1590 = vmul.f32 %v1589, %v1582
      %v1591 = vadd.f32 %v1582, %v1590
      %v1592 = vmul.f32 %v1591, 0.7978846
      %v1593 = vtanh.pop %v1592
      %v1594 = vadd.f32 %v1593, 1.0
      %v1595 = vmul.f32 %v1587, %v1594
      %v1596 = vpack.c.bf16 %v1595, %v1595
      %v1597 = vld [vmem:[%s670] sm:$0xf]
      %v1598 = vld [vmem:[%s670 + $0x4] sm:$0xf]
      %v1599 = vld [vmem:[%s670 + $0x8] sm:$0xf]
      %v1600 = vld [vmem:[%s670 + $0xc] sm:$0xf]
      %v1601 = vld [vmem:[%s670 + $0x10] sm:$0xf]
      %v1602 = vld [vmem:[%s670 + $0x14] sm:$0xf]
      %v1603 = vld [vmem:[%s670 + $0x18] sm:$0xf]
      %v1604 = vld [vmem:[%s670 + $0x1c] sm:$0xf]
      %v1605 = vld [vmem:[%s670 + $0x20] sm:$0xf]
      %v1606 = vld [vmem:[%s670 + $0x24] sm:$0xf]
      %v1607 = vld [vmem:[%s670 + $0x28] sm:$0xf]
      %v1608 = vld [vmem:[%s670 + $0x2c] sm:$0xf]
      %v1609 = vld [vmem:[%s670 + $0x30] sm:$0xf]
      %v1610 = vld [vmem:[%s670 + $0x34] sm:$0xf]
      %v1611 = vld [vmem:[%s670 + $0x38] sm:$0xf]
      %v1612 = vld [vmem:[%s670 + $0x3c] sm:$0xf]
      %v1613 = vld [vmem:[%s673] sm:$0x1]
      %v1615 = vlaneseq
      %v1616 = vshrl.u32 %v1615, 7
      %v1617 = vsub.s32 0, %v1616
      %v1618 = vrot.slane %v1613, %v1617
      %v1636 = vunpack.c.l.b16 %v1597
      %v1637 = vunpack.c.l.b16 %v1598
      %v1638 = vunpack.c.l.b16 %v1599
      %v1639 = vunpack.c.l.b16 %v1600
      %v1640 = vunpack.c.l.b16 %v1601
      %v1641 = vunpack.c.l.b16 %v1602
      %v1642 = vunpack.c.l.b16 %v1603
      %v1643 = vunpack.c.l.b16 %v1604
      %v1644 = vunpack.c.l.b16 %v1605
      %v1645 = vunpack.c.l.b16 %v1606
      %v1646 = vunpack.c.l.b16 %v1607
      %v1647 = vunpack.c.l.b16 %v1608
      %v1648 = vunpack.c.l.b16 %v1609
      %v1649 = vunpack.c.l.b16 %v1610
      %v1650 = vunpack.c.l.b16 %v1611
      %v1651 = vunpack.c.l.b16 %v1612
      %v1652 = vpack.c.b16 %v1637, %v1636
      %v1653 = vpack.c.b16 %v1639, %v1638
      %v1654 = vpack.c.b16 %v1641, %v1640
      %v1655 = vpack.c.b16 %v1643, %v1642
      %v1656 = vpack.c.b16 %v1645, %v1644
      %v1657 = vpack.c.b16 %v1647, %v1646
      %v1658 = vpack.c.b16 %v1649, %v1648
      %v1659 = vpack.c.b16 %v1651, %v1650
      %1668 = vmatprep.subr.bf16.mxu0 0
      %1669 = vmatpush1.bf16.msra.mxu0 %v1652
      %1670 = vmatprep.subr.bf16.mxu0 0
      %1671 = vmatpush1.bf16.msra.mxu0 %v1653
      %1672 = vmatprep.subr.bf16.mxu0 0
      %1673 = vmatpush1.bf16.msra.mxu0 %v1654
      %1674 = vmatprep.subr.bf16.mxu0 0
      %1675 = vmatpush1.bf16.msra.mxu0 %v1655
      %1676 = vmatprep.subr.bf16.mxu0 0
      %1677 = vmatpush1.bf16.msra.mxu0 %v1656
      %1678 = vmatprep.subr.bf16.mxu0 0
      %1679 = vmatpush1.bf16.msra.mxu0 %v1657
      %1680 = vmatprep.subr.bf16.mxu0 0
      %1681 = vmatpush1.bf16.msra.mxu0 %v1658
      %1682 = vmatprep.subr.bf16.mxu0 0
      %1683 = vmatpush1.bf16.msra.mxu0 %v1659
      %1684 = vmatprep.subr.bf16.mxu0 0
      %1685 = vmatpush1.bf16.msra.mxu0 0
      %1686 = vmatprep.subr.bf16.mxu0 0
      %1687 = vmatpush1.bf16.msra.mxu0 0
      %1688 = vmatprep.subr.bf16.mxu0 0
      %1689 = vmatpush1.bf16.msra.mxu0 0
      %1690 = vmatprep.subr.bf16.mxu0 0
      %1691 = vmatpush1.bf16.msra.mxu0 0
      %1692 = vmatprep.subr.bf16.mxu0 0
      %1693 = vmatpush1.bf16.msra.mxu0 0
      %1694 = vmatprep.subr.bf16.mxu0 0
      %1695 = vmatpush1.bf16.msra.mxu0 0
      %1696 = vmatprep.subr.bf16.mxu0 0
      %1697 = vmatpush1.bf16.msra.mxu0 0
      %1698 = vmatprep.subr.bf16.mxu0 0
      %1699 = vmatpush1.bf16.msra.mxu0 0
      %1700 = vmatprep.mubr.bf16.mxu0 0
      %1701 = vmatmul.mubr.bf16.gmra.mrb[0].mxu0 %v1596
      %v1702 = vpop.f32.mrb[0].mxu0
      %v1703 = vadd.f32 %v1618, %v1702
      %v1704 = vpop.f32.mrb[0].mxu0
      %v1705 = vpop.f32.mrb[0].mxu0
      %v1706 = vpop.f32.mrb[0].mxu0
      %1707 = vdwg.mxu0
      %v1708 = vadd.f32 %v1703, %v1503
      %v1709 = vld [vmem:[%s676] sm:$0x1]
      %v1710 = vld [vmem:[%s679] sm:$0x1]
      %v1711 = vsel %vm755, %v1708, 0.0
      %1712 = vadd.xlane.f32.xlu0 %v1711
      %v1713 = vpop.xlane.xlu0 %1712
      %v1714 = vmul.f32 %v1713, %v1479
      %v1715 = vsub.f32 %v1708, %v1714
      %v1716 = vmul.f32 %v1715, %v1715
      %v1717 = vsel %vm755, %v1716, 0.0
      %1718 = vadd.xlane.f32.xlu0 %v1717
      %v1719 = vpop.xlane.xlu0 %1718
      %v1720 = vmul.f32 %v1719, %v1479
      %v1721 = vadd.f32 %v1720, 1e-12
      %v1722 = vrsqrt.pop %v1721
      %v1723 = vmul.f32 %v1715, %v1722
      %v1725 = vlaneseq
      %v1726 = vshrl.u32 %v1725, 7
      %v1727 = vsub.s32 0, %v1726
      %v1728 = vrot.slane %v1709, %v1727
      %v1730 = vmul.f32 %v1723, %v1728
      %v1732 = vlaneseq
      %v1733 = vshrl.u32 %v1732, 7
      %v1734 = vsub.s32 0, %v1733
      %v1735 = vrot.slane %v1710, %v1734
      %v1737 = vadd.f32 %v1730, %v1735
      %1738 = vst.msk [vmem:[#allocation2] sm:$0xff] %vm755, %v1737
      %p1739 = scmp.eq.s32.totalorder %s30, 1
      // Predicated region
      $region81: #{bert_base_uncased_tweet_forward.4} parent=75 // pred_check
        %p1740 = pneg %p1739
      $region82: #{bert_base_uncased_tweet_forward.4} parent=75 // pred_check_branch
        %1742 = sbr.rel (%p1740) target = $region84
      $region83: #{bert_base_uncased_tweet_forward.4} parent=75 // pred_region
        %v1743 = vpack.c.bf16 %v1737, %v1737
        %vm1744 = vcmask 519168
        %1745 = vst.msk [vmem:[%s683] sm:$0xf] %vm1744, %v1743
      $region84: #{bert_base_uncased_tweet_forward.4} parent=75 // pred_fallthru
        _
      %p1746 = scmp.lt.s32.totalorder %s29, 1
      %s1747 = scalar_select %p1746, %s29, 1
      %s1748 = smul.addr %s1747, 4
      %s1749 = scalar_lea.vmem %s14, %s1748
      // Predicated region
      $region85: #{bert_base_uncased_tweet_forward.4} parent=75 // pred_check
        %p1750 = pneg %p419
      $region86: #{bert_base_uncased_tweet_forward.4} parent=75 // pred_check_branch
        %1752 = sbr.rel (%p1750) target = $region88
      $region87: #{bert_base_uncased_tweet_forward.4} parent=75 // pred_region
        _
      $region88: #{bert_base_uncased_tweet_forward.4} parent=75 // pred_fallthru
        _
    $region76: #{bert_base_uncased_tweet_forward.4} parent=5 // pred_fallthru
      _
    %p1753 = scmp.le.s32.totalorder 2, %s20
    // Predicated region
    $region89: #{bert_base_uncased_tweet_forward.4} parent=5 // pred_check
      %p1754 = pneg %p1753
    $region90: #{bert_base_uncased_tweet_forward.4} parent=5 // pred_check_branch
      %1756 = sbr.rel (%p1754) target = $region92
    $region91: #{bert_base_uncased_tweet_forward.4} parent=5 // pred_region
      %s1757 = ssub.s32 %s20, 2
      // Predicated region
      $region93: #{bert_base_uncased_tweet_forward.4} parent=91 // pred_check
        %p1758 = pneg %p425
      $region94: #{bert_base_uncased_tweet_forward.4} parent=91 // pred_check_branch
        %1760 = sbr.rel (%p1758) target = $region96
      $region95: #{bert_base_uncased_tweet_forward.4} parent=91 // pred_region
        %p1761 = scmp.lt.s32.totalorder %s31, 1
        %s1762 = scalar_select %p1761, %s31, 1
        %s1763 = smul.addr %s1762, 4
        %s1764 = scalar_lea.vmem %s14, %s1763
      $region96: #{bert_base_uncased_tweet_forward.4} parent=91 // pred_fallthru
        _
    $region92: #{bert_base_uncased_tweet_forward.4} parent=5 // pred_fallthru
      _
  $region6: #{bert_base_uncased_tweet_forward.4} parent=0 // loop_footer
    %s24 = sadd.s32 1, %s20
  $region7: #{bert_base_uncased_tweet_forward.4} parent=0 // loop_footer_branch
    %19 = sbr.rel target = $region3
  $region8: #{bert_base_uncased_tweet_forward.4} parent=0 // loop_exit
    _

</llo_original>
